<compile_context>
chip_gen: v5e
topology: v5e:2x2
jax: 0.10.0
libtpu: 0.0.40
codegen_flags: <defaults>
</compile_context>

<pallas_src>
import functools

import jax
import jax.numpy as jnp
from jax.experimental import pallas as pl
from jax.experimental.pallas import tpu as pltpu

EPS = 1e-5        # nn.BatchNorm2d default eps
SLOPE = 0.01      # nn.LeakyReLU default negative_slope (module uses the default)
LANE = 128


def _round_up(x, m):
    return (x + m - 1) // m * m


def _detect_vmem_bytes():
    try:
        info = pltpu.get_tpu_info()
        cap = getattr(info, "vmem_capacity_bytes", None)
        if cap:
            return int(cap)
    except Exception:
        pass
    return 64 << 20   # conservative (v7x-sized) default


_VMEM_PHYS = _detect_vmem_bytes()
_TM_MAX = 1024 if _VMEM_PHYS >= (100 << 20) else 512     # review #5/#6
_TM_BN_MAX = 2048                                        # review #7
_BUDGET = int(min(_VMEM_PHYS * 0.35, 40 << 20))          # per-call working-set budget
_VMEM_CAP = int(min(_VMEM_PHYS * 0.85, 100 << 20))


def _compiler_params(est_bytes, dims):
    vmem = int(min(max(est_bytes + (8 << 20), 32 << 20), _VMEM_CAP))
    return pltpu.CompilerParams(dimension_semantics=dims, vmem_limit_bytes=vmem)


# ---------------------------------------------------------------------------
# Tile-size selection (honest VMEM accounting: resident weight + scratch + outs)
# ---------------------------------------------------------------------------
def _choose_tm_fused(M_img, OW, KH, Cp):
    fixed = 4 * KH * Cp + 4 * OW * KH + 64 * Cp          # dbl-buffered weight, halo, stats
    per_row = 4 * KH + 4 * Cp                            # scratch rows + bf16 y (dbl-buffered)
    cap = max((_BUDGET - fixed) // per_row, 8)
    cap = int(min(cap, _TM_MAX, M_img))
    tm = 8
    for cand in range(8, cap + 1, 8):                    # multiple of 8, divisor of M_img
        if M_img % cand == 0:
            tm = cand
    return tm


def _choose_tm_im2col(M, K, Cp):
    fixed = 4 * K * Cp                                   # dbl-buffered bf16 weight
    per_row = 4 * K + 8 * Cp
    cap = max((_BUDGET - fixed) // per_row, 8)
    tm = min(_TM_MAX, _round_up(M, 8), cap)
    return max((tm // 8) * 8, 8)


def _choose_tm_bn(rows, Cp):
    cap = min(_TM_BN_MAX, rows, max(_BUDGET // (8 * Cp), 8))
    cap = max(int(cap), 8)
    tm = 8
    for cand in range(8, cap + 1, 8):
        if rows % cand == 0:
            tm = cand
    return tm


# ---------------------------------------------------------------------------
# Pallas kernels
# ---------------------------------------------------------------------------
def _matmul_stats_kernel(p_ref, w_ref, y_ref, s_ref, ss_ref):
    """Fallback path: bf16 (tm,K) @ (K,Cp) -> bf16 y tile + f32 channel sum/sumsq."""
    y = jnp.dot(p_ref[...], w_ref[...], preferred_element_type=jnp.float32)
    y_ref[...] = y.astype(y_ref.dtype)
    s_ref[...] = jnp.sum(y, axis=0, keepdims=True)[None]
    ss_ref[...] = jnp.sum(y * y, axis=0, keepdims=True)[None]


def _bn_lrelu_kernel(y_ref, sc_ref, sh_ref, o_ref):
    """Fused BatchNorm affine (pre-folded scale/shift) + LeakyReLU; f32 math, bf16 io."""
    z = y_ref[...].astype(jnp.float32) * sc_ref[...] + sh_ref[...]
    o_ref[...] = jnp.maximum(z, SLOPE * z).astype(o_ref.dtype)


# ---------------------------------------------------------------------------
# Fused direct conv (k=4, s=2, p=1) + BN statistics: no HBM im2col patch matrix.
# R[n, r*OW+ow, (dy,kw,c)] = x_pad[n, 2r+dy, 2ow+kw, c]; output row m of image n
# needs R rows m and m+OW, so each grid step DMAs one halo'ed contiguous slab.
# ---------------------------------------------------------------------------
def fused_conv_bn_stats(r, w_fused, *, N, MT, TM, OW, KH, Cp):
    TMH = TM + OW

    def kernel(r_hbm, w_ref, y_ref, s_ref, ss_ref, buf, sem):
        n = pl.program_id(0)
        i = pl.program_id(1)
        slot = i % 2

        @pl.when(i == 0)                              # first tile of this image
        def _():
            pltpu.make_async_copy(r_hbm.at[n, pl.ds(0, TMH)],
                                  buf.at[0], sem.at[0]).start()

        @pl.when(i + 1 < MT)                          # prefetch next tile of same image
        def _():
            pltpu.make_async_copy(r_hbm.at[n, pl.ds((i + 1) * TM, TMH)],
                                  buf.at[1 - slot], sem.at[1 - slot]).start()

        pltpu.make_async_copy(r_hbm.at[n, pl.ds(i * TM, TMH)],
                              buf.at[slot], sem.at[slot]).wait()

        x0 = buf[slot, pl.ds(0, TM), :]               # kernel rows 0..1
        x1 = buf[slot, pl.ds(OW, TM), :]              # kernel rows 2..3 (row halo)
        y = jnp.dot(x0, w_ref[0], preferred_element_type=jnp.float32)
        y = y + jnp.dot(x1, w_ref[1], preferred_element_type=jnp.float32)
        y_ref[...] = y.astype(y_ref.dtype)[None]      # bf16 pass-through (review #2)
        s_ref[...] = jnp.sum(y, axis=0).reshape(1, 1, Cp)
        ss_ref[...] = jnp.sum(y * y, axis=0).reshape(1, 1, Cp)

    est = 8 * KH * Cp + 4 * TMH * KH + 4 * TM * Cp + 32 * Cp
    return pl.pallas_call(
        kernel,
        out_shape=(
            jax.ShapeDtypeStruct((N, MT * TM, Cp), jnp.bfloat16),
            jax.ShapeDtypeStruct((N * MT, 1, Cp), jnp.float32),
            jax.ShapeDtypeStruct((N * MT, 1, Cp), jnp.float32),
        ),
        grid=(N, MT),
        in_specs=[
            pl.BlockSpec(memory_space=pl.ANY),                       # R stays in HBM
            pl.BlockSpec((2, KH, Cp), lambda n, i: (0, 0, 0)),       # resident weight
        ],
        out_specs=(
            pl.BlockSpec((1, TM, Cp), lambda n, i: (n, i, 0)),
            pl.BlockSpec((1, 1, Cp), lambda n, i: (n * MT + i, 0, 0)),
            pl.BlockSpec((1, 1, Cp), lambda n, i: (n * MT + i, 0, 0)),
        ),
        scratch_shapes=[
            pltpu.VMEM((2, TMH, KH), jnp.bfloat16),
            pltpu.SemaphoreType.DMA((2,)),
        ],
        compiler_params=_compiler_params(est, ("parallel", "arbitrary")),
        cost_estimate=pl.CostEstimate(
            flops=4 * N * MT * TM * KH * Cp,
            transcendentals=0,
            bytes_accessed=(N * (MT * TM + OW) * KH * 2 + 4 * KH * Cp
                            + N * MT * TM * Cp * 2 + 8 * N * MT * Cp),
        ),
    )(r, w_fused)


def matmul_stats(patches, w2d, *, tm):
    """Fallback (generic k/s/p BN conv) im2col matmul with per-tile stats."""
    Mp, K = patches.shape
    Cp = w2d.shape[1]
    mt = Mp // tm
    est = 4 * K * Cp + 4 * tm * K + 4 * tm * Cp + 32 * Cp
    return pl.pallas_call(
        _matmul_stats_kernel,
        out_shape=(
            jax.ShapeDtypeStruct((Mp, Cp), jnp.bfloat16),
            jax.ShapeDtypeStruct((mt, 1, Cp), jnp.float32),
            jax.ShapeDtypeStruct((mt, 1, Cp), jnp.float32),
        ),
        grid=(mt,),
        in_specs=[
            pl.BlockSpec((tm, K), lambda i: (i, 0)),
            pl.BlockSpec((K, Cp), lambda i: (0, 0)),
        ],
        out_specs=(
            pl.BlockSpec((tm, Cp), lambda i: (i, 0)),
            pl.BlockSpec((1, 1, Cp), lambda i: (i, 0, 0)),
            pl.BlockSpec((1, 1, Cp), lambda i: (i, 0, 0)),
        ),
        compiler_params=_compiler_params(est, ("parallel",)),
        cost_estimate=pl.CostEstimate(
            flops=2 * Mp * K * Cp, transcendentals=0,
            bytes_accessed=Mp * K * 2 + K * Cp * 2 + Mp * Cp * 2 + 8 * mt * Cp),
    )(patches, w2d)


def bn_lrelu(y, scale, shift):
    """Elementwise BN affine + LeakyReLU with its own (large) row tile (review #7)."""
    R, Cp = y.shape
    tm = _choose_tm_bn(R, Cp)
    Rp = _round_up(R, tm)
    if Rp != R:
        y = jnp.pad(y, ((0, Rp - R), (0, 0)))
    mt = Rp // tm
    est = 8 * tm * Cp + 16 * Cp
    out = pl.pallas_call(
        _bn_lrelu_kernel,
        out_shape=jax.ShapeDtypeStruct((Rp, Cp), jnp.bfloat16),
        grid=(mt,),
        in_specs=[
            pl.BlockSpec((tm, Cp), lambda i: (i, 0)),
            pl.BlockSpec((1, Cp), lambda i: (0, 0)),
            pl.BlockSpec((1, Cp), lambda i: (0, 0)),
        ],
        out_specs=pl.BlockSpec((tm, Cp), lambda i: (i, 0)),
        compiler_params=_compiler_params(est, ("parallel",)),
        cost_estimate=pl.CostEstimate(flops=3 * Rp * Cp, transcendentals=0,
                                      bytes_accessed=Rp * Cp * 4 + 8 * Cp),
    )(y, scale, shift)
    return out[:R]


# ---------------------------------------------------------------------------
# Glue (plain JAX; runs inside jax.jit around the pallas_calls)
# ---------------------------------------------------------------------------
def im2col_nhwc(x, k, stride, pad):
    """x: (N,H,W,C) -> (N*OH*OW, k*k*C) patches, K ordered (kh, kw, c)."""
    if pad:
        x = jnp.pad(x, ((0, 0), (pad, pad), (pad, pad), (0, 0)))
    N, H, W, C = x.shape
    OH = (H - k) // stride + 1
    OW = (W - k) // stride + 1
    cols = []
    for i in range(k):
        for j in range(k):
            cols.append(x[:, i:i + stride * OH:stride, j:j + stride * OW:stride, :])
    patches = jnp.stack(cols, axis=3)                 # (N, OH, OW, k*k, C)
    return patches.reshape(N * OH * OW, k * k * C), OH, OW


def _prep_conv_weight(w, cin_pad, cout_pad):
    """(Cout,Cin,k,k) -> bf16 (k*k*cin_pad, cout_pad), K ordered (kh, kw, cin)."""
    cout, cin, k, _ = w.shape
    w = jnp.transpose(w, (2, 3, 1, 0))                # (k, k, cin, cout)
    w = jnp.pad(w, ((0, 0), (0, 0), (0, cin_pad - cin), (0, cout_pad - cout)))
    return w.reshape(k * k * cin_pad, cout_pad).astype(jnp.bfloat16)


def _bn_finalize(s_y, s_yy, m_true, gamma, beta):
    mean = s_y / m_true                               # training-mode batch stats
    var = jnp.maximum(s_yy / m_true - mean * mean, 0.0)
    scale = gamma * jax.lax.rsqrt(var + EPS)          # padded channels stay exactly 0
    shift = beta - mean * scale
    return scale.reshape(1, -1), shift.reshape(1, -1)


def _conv_bn_lrelu_fused(x, w2d, gamma, beta, *, cout_p):
    """k=4, s=2, p=1 conv + BatchNorm + LeakyReLU without an HBM patch matrix."""
    N, H, W, C = x.shape
    OH, OW = H // 2, W // 2
    M_img = OH * OW
    KH = 8 * C
    xp = jnp.pad(x, ((0, 0), (1, 1), (1, 1), (0, 0)))
    cols = []
    for dy in range(2):
        for kw in range(4):
            cols.append(xp[:, dy:dy + 2 * OH + 1:2, kw:kw + 2 * OW - 1:2, :])
    r = jnp.stack(cols, axis=3).reshape(N, (OH + 1) * OW, KH)   # ~2x activation bytes

    TM = _choose_tm_fused(M_img, OW, KH, cout_p)
    MT = pl.cdiv(M_img, TM)
    rows_needed = MT * TM + OW
    if rows_needed > r.shape[1]:
        r = jnp.pad(r, ((0, 0), (0, rows_needed - r.shape[1]), (0, 0)))
    w_fused = w2d.reshape(2, KH, cout_p)              # (kh<2 | kh>=2) halves

    y, ps, pss = fused_conv_bn_stats(r, w_fused, N=N, MT=MT, TM=TM, OW=OW,
                                     KH=KH, Cp=cout_p)
    scale, shift = _bn_finalize(jnp.sum(ps, axis=(0, 1)), jnp.sum(pss, axis=(0, 1)),
                                N * M_img, gamma, beta)
    out = bn_lrelu(y.reshape(N * MT * TM, cout_p), scale, shift)
    out = out.reshape(N, MT * TM, cout_p)[:, :M_img]
    return out.reshape(N, OH, OW, cout_p)


def _conv_bn_lrelu_im2col(x, w2d, gamma, beta, *, k, s, p, cout_p):
    """Generic fallback path (e.g. extra 3x3/s1 layers) via im2col matmul."""
    N = x.shape[0]
    patches, OH, OW = im2col_nhwc(x, k, s, p)
    M, K = patches.shape
    tm = _choose_tm_im2col(M, K, cout_p)
    Mp = _round_up(M, tm)
    if Mp != M:
        patches = jnp.pad(patches, ((0, Mp - M), (0, 0)))   # zero rows: inert in stats
    y, ps, pss = matmul_stats(patches, w2d, tm=tm)
    scale, shift = _bn_finalize(jnp.sum(ps, axis=(0, 1)), jnp.sum(pss, axis=(0, 1)),
                                M, gamma, beta)
    out = bn_lrelu(y, scale, shift)[:M]
    return out.reshape(N, OH, OW, cout_p)


def build_layer_cfgs(input_size, channel, ndf, n_extra_layers=0, add_final_conv=True):
    assert input_size % 16 == 0, "input_size has to be a multiple of 16"
    cfgs = [dict(cin=channel, cout=ndf, k=4, s=2, p=1, bn=True)]
    csize, cndf = input_size // 2, ndf
    for _ in range(n_extra_layers):
        cfgs.append(dict(cin=cndf, cout=cndf, k=3, s=1, p=1, bn=True))
    while csize > 4:
        cfgs.append(dict(cin=cndf, cout=cndf * 2, k=4, s=2, p=1, bn=True))
        cndf *= 2
        csize //= 2
    if add_final_conv:
        cfgs.append(dict(cin=cndf, cout=1, k=4, s=1, p=0, bn=False))
    return cfgs


def init_params(key, cfgs):
    params = []
    for cfg in cfgs:
        key, kw, kb, kg, kbe = jax.random.split(key, 5)
        w = 0.05 * jax.random.normal(
            kw, (cfg["cout"], cfg["cin"], cfg["k"], cfg["k"]), jnp.float32)
        b = 0.05 * jax.random.normal(kb, (cfg["cout"],), jnp.float32)
        p = dict(w=w, b=b)   # conv bias unused for BN layers (cancelled exactly by BN)
        if cfg["bn"]:
            p["gamma"] = 1.0 + 0.1 * jax.random.normal(kg, (cfg["cout"],), jnp.float32)
            p["beta"] = 0.1 * jax.random.normal(kbe, (cfg["cout"],), jnp.float32)
        params.append(p)
    return params


def discriminator_forward(x_nchw, params, cfgs, use_fused=True):
    """External interface NCHW (PyTorch-like); internally NHWC with padded lanes."""
    x = jnp.transpose(x_nchw, (0, 2, 3, 1)).astype(jnp.bfloat16)
    cp_cur = x.shape[-1]
    c_real = x.shape[-1]
    for cfg, prm in zip(cfgs, params):
        k, s, pad, cout = cfg["k"], cfg["s"], cfg["p"], cfg["cout"]
        if not cfg["bn"]:
            # Final conv (Cout=1, M=N): plain XLA dot inside the jit (review #8).
            w2d = _prep_conv_weight(prm["w"], cp_cur, cout)
            patches, OH, OW = im2col_nhwc(x, k, s, pad)
            out = (jnp.dot(patches, w2d, preferred_element_type=jnp.float32)
                   + prm["b"].astype(jnp.float32)[None, :])
            x = out.reshape(x.shape[0], OH, OW, cout)
            cp_cur = cout
            c_real = cout
            continue
        cout_p = _round_up(cout, LANE)
        gamma = jnp.pad(prm["gamma"], (0, cout_p - cout))
        beta = jnp.pad(prm["beta"], (0, cout_p - cout))
        w2d = _prep_conv_weight(prm["w"], cp_cur, cout_p)
        if use_fused and k == 4 and s == 2 and pad == 1:
            x = _conv_bn_lrelu_fused(x, w2d, gamma, beta, cout_p=cout_p)
        else:
            x = _conv_bn_lrelu_im2col(x, w2d, gamma, beta, k=k, s=s, p=pad,
                                      cout_p=cout_p)
        cp_cur = cout_p
        c_real = cout
    # Back to NCHW at the module boundary; drop lane padding.
    return jnp.transpose(x, (0, 3, 1, 2))[:, :c_real]


# ---------------------------------------------------------------------------
if __name__ == "__main__":
    # Small forward-consistent shapes: input_size=16, channel=4, ndf=8, batch=2.
    input_size, channel, ndf = 16, 4, 8
    batch = 2

    cfgs = build_layer_cfgs(input_size, channel, ndf, n_extra_layers=0,
                            add_final_conv=True)
    key = jax.random.PRNGKey(0)
    key, kx = jax.random.split(key)
    params = init_params(key, cfgs)
    x = jax.random.normal(kx, (batch, channel, input_size, input_size), jnp.float32)

    def run(use_fused):
        fwd = jax.jit(functools.partial(discriminator_forward, cfgs=cfgs,
                                        use_fused=use_fused))
        return jax.block_until_ready(fwd(x, params))

    try:
        out = run(True)
    except Exception:
        # Safety net: fall back to the proven im2col Pallas path if the fused
        # direct-conv kernel does not lower on this jax/libtpu combination.
        out = run(False)

    assert out.shape == (batch, 1, 1, 1), out.shape
    assert bool(jnp.all(jnp.isfinite(out)))
    print("KERNEL_OK")
</pallas_src>

<mosaic_0001>
module attributes {stable_mosaic.version = 11 : i64} {
  func.func @kernel(%arg0: i32, %arg1: i32, %arg2: memref<2x72x32xbf16, #tpu.memory_space<any>>, %arg3: memref<2x32x128xbf16, #tpu.memory_space<vmem>>, %arg4: memref<1x64x128xbf16, #tpu.memory_space<vmem>>, %arg5: memref<1x1x128xf32, #tpu.memory_space<vmem>>, %arg6: memref<1x1x128xf32, #tpu.memory_space<vmem>>, %arg7: memref<2x72x32xbf16, #tpu.memory_space<vmem>>, %arg8: memref<2x!tpu.dma_semaphore, #tpu.memory_space<semaphore_mem>>) attributes {dimension_semantics = [#tpu.dimension_semantics<parallel>, #tpu.dimension_semantics<arbitrary>], iteration_bounds = array<i64: 2, 1>, scalar_prefetch = 0 : i64, scratch_operands = 2 : i64, tpu.core_type = #tpu.core_type<tc>, window_params = [{}, {pipeline_mode = #tpu.pipeline_mode<synchronous>, transform_indices = @transform_1, window_bounds = array<i64: 2, 32, 128>}, {transform_indices = @transform_2, window_bounds = array<i64: 1, 64, 128>}, {transform_indices = @transform_3, window_bounds = array<i64: 1, 1, 128>}, {transform_indices = @transform_4, window_bounds = array<i64: 1, 1, 128>}]} {
    %c2_i32 = arith.constant 2 : i32
    %c0_i32 = arith.constant 0 : i32
    %0 = arith.cmpi eq, %c2_i32, %c0_i32 : i32
    %c1_i32 = arith.constant 1 : i32
    %1 = arith.select %0, %c1_i32, %c2_i32 : i32
    %2 = arith.remsi %arg1, %1 : i32
    %c0_i32_0 = arith.constant 0 : i32
    %3 = arith.cmpi ne, %2, %c0_i32_0 : i32
    %c0_i32_1 = arith.constant 0 : i32
    %4 = arith.cmpi slt, %2, %c0_i32_1 : i32
    %c0_i32_2 = arith.constant 0 : i32
    %5 = arith.cmpi slt, %1, %c0_i32_2 : i32
    %6 = arith.xori %4, %5 : i1
    %7 = arith.andi %6, %3 : i1
    %8 = arith.addi %2, %1 : i32
    %9 = arith.select %7, %8, %2 : i32
    %c0_i32_3 = arith.constant 0 : i32
    %10 = arith.cmpi eq, %arg1, %c0_i32_3 : i32
    %11 = arith.extui %10 : i1 to i32
    %c0_i32_4 = arith.constant 0 : i32
    %12 = arith.cmpi ne, %11, %c0_i32_4 : i32
    scf.if %12 {
      %c0_i32_30 = arith.constant 0 : i32
      %c0_i32_31 = arith.constant 0 : i32
      %c0_i32_32 = arith.constant 0 : i32
      %c0_i32_33 = arith.constant 0 : i32
      %47 = tpu.memref_slice %arg2[%arg0, %c0_i32_32, %c0_i32_33] : memref<2x72x32xbf16, #tpu.memory_space<any>> -> memref<1x72x32xbf16, #tpu.memory_space<any>>
      %48 = tpu.memref_squeeze %47 : memref<1x72x32xbf16, #tpu.memory_space<any>> -> memref<72x32xbf16, #tpu.memory_space<any>>
      %c0_i32_34 = arith.constant 0 : i32
      %c0_i32_35 = arith.constant 0 : i32
      %49 = tpu.memref_slice %arg7[%c0_i32_30, %c0_i32_34, %c0_i32_35] : memref<2x72x32xbf16, #tpu.memory_space<vmem>> -> memref<1x72x32xbf16, #tpu.memory_space<vmem>>
      %50 = tpu.memref_squeeze %49 : memref<1x72x32xbf16, #tpu.memory_space<vmem>> -> memref<72x32xbf16, #tpu.memory_space<vmem>>
      %51 = tpu.memref_slice %arg8[%c0_i32_31] : memref<2x!tpu.dma_semaphore, #tpu.memory_space<semaphore_mem>> -> memref<1x!tpu.dma_semaphore, #tpu.memory_space<semaphore_mem>>
      %52 = tpu.memref_squeeze %51 : memref<1x!tpu.dma_semaphore, #tpu.memory_space<semaphore_mem>> -> memref<!tpu.dma_semaphore, #tpu.memory_space<semaphore_mem>>
      tpu.enqueue_dma source(%48 : memref<72x32xbf16, #tpu.memory_space<any>>) target(%50 : memref<72x32xbf16, #tpu.memory_space<vmem>>) target_semaphore(%52 : memref<!tpu.dma_semaphore, #tpu.memory_space<semaphore_mem>>)
    } else {
    }
    %c1_i32_5 = arith.constant 1 : i32
    %13 = arith.addi %arg1, %c1_i32_5 : i32
    %c1_i32_6 = arith.constant 1 : i32
    %14 = arith.cmpi slt, %13, %c1_i32_6 : i32
    %15 = arith.extui %14 : i1 to i32
    %c0_i32_7 = arith.constant 0 : i32
    %16 = arith.cmpi ne, %15, %c0_i32_7 : i32
    scf.if %16 {
      %c1_i32_30 = arith.constant 1 : i32
      %47 = arith.addi %arg1, %c1_i32_30 : i32
      %c64_i32_31 = arith.constant 64 : i32
      %48 = arith.muli %47, %c64_i32_31 : i32
      %c1_i32_32 = arith.constant 1 : i32
      %49 = arith.subi %c1_i32_32, %9 : i32
      %c1_i32_33 = arith.constant 1 : i32
      %50 = arith.subi %c1_i32_33, %9 : i32
      %c0_i32_34 = arith.constant 0 : i32
      %51 = tpu.memref_slice %arg2[%arg0, %48, %c0_i32_34] : memref<2x72x32xbf16, #tpu.memory_space<any>> -> memref<1x72x32xbf16, #tpu.memory_space<any>>
      %52 = tpu.memref_squeeze %51 : memref<1x72x32xbf16, #tpu.memory_space<any>> -> memref<72x32xbf16, #tpu.memory_space<any>>
      %c0_i32_35 = arith.constant 0 : i32
      %c0_i32_36 = arith.constant 0 : i32
      %53 = tpu.memref_slice %arg7[%49, %c0_i32_35, %c0_i32_36] : memref<2x72x32xbf16, #tpu.memory_space<vmem>> -> memref<1x72x32xbf16, #tpu.memory_space<vmem>>
      %54 = tpu.memref_squeeze %53 : memref<1x72x32xbf16, #tpu.memory_space<vmem>> -> memref<72x32xbf16, #tpu.memory_space<vmem>>
      %55 = tpu.memref_slice %arg8[%50] : memref<2x!tpu.dma_semaphore, #tpu.memory_space<semaphore_mem>> -> memref<1x!tpu.dma_semaphore, #tpu.memory_space<semaphore_mem>>
      %56 = tpu.memref_squeeze %55 : memref<1x!tpu.dma_semaphore, #tpu.memory_space<semaphore_mem>> -> memref<!tpu.dma_semaphore, #tpu.memory_space<semaphore_mem>>
      tpu.enqueue_dma source(%52 : memref<72x32xbf16, #tpu.memory_space<any>>) target(%54 : memref<72x32xbf16, #tpu.memory_space<vmem>>) target_semaphore(%56 : memref<!tpu.dma_semaphore, #tpu.memory_space<semaphore_mem>>)
    } else {
    }
    %c64_i32 = arith.constant 64 : i32
    %17 = arith.muli %arg1, %c64_i32 : i32
    %c0_i32_8 = arith.constant 0 : i32
    %18 = tpu.memref_slice %arg2[%arg0, %17, %c0_i32_8] : memref<2x72x32xbf16, #tpu.memory_space<any>> -> memref<1x72x32xbf16, #tpu.memory_space<any>>
    %19 = tpu.memref_squeeze %18 : memref<1x72x32xbf16, #tpu.memory_space<any>> -> memref<72x32xbf16, #tpu.memory_space<any>>
    %c0_i32_9 = arith.constant 0 : i32
    %c0_i32_10 = arith.constant 0 : i32
    %20 = tpu.memref_slice %arg7[%9, %c0_i32_9, %c0_i32_10] : memref<2x72x32xbf16, #tpu.memory_space<vmem>> -> memref<1x72x32xbf16, #tpu.memory_space<vmem>>
    %21 = tpu.memref_squeeze %20 : memref<1x72x32xbf16, #tpu.memory_space<vmem>> -> memref<72x32xbf16, #tpu.memory_space<vmem>>
    %22 = tpu.memref_slice %arg8[%9] : memref<2x!tpu.dma_semaphore, #tpu.memory_space<semaphore_mem>> -> memref<1x!tpu.dma_semaphore, #tpu.memory_space<semaphore_mem>>
    %23 = tpu.memref_squeeze %22 : memref<1x!tpu.dma_semaphore, #tpu.memory_space<semaphore_mem>> -> memref<!tpu.dma_semaphore, #tpu.memory_space<semaphore_mem>>
    tpu.wait_dma2 semaphore(%23 : memref<!tpu.dma_semaphore, #tpu.memory_space<semaphore_mem>>) src(%19 : memref<72x32xbf16, #tpu.memory_space<any>>) dst(%21 : memref<72x32xbf16, #tpu.memory_space<vmem>>)
    %24 = arith.index_cast %9 : i32 to index
    %c0 = arith.constant 0 : index
    %c0_11 = arith.constant 0 : index
    %25 = vector.load %arg7[%24, %c0, %c0_11] : memref<2x72x32xbf16, #tpu.memory_space<vmem>>, vector<1x64x32xbf16>
    %26 = vector.shape_cast %25 : vector<1x64x32xbf16> to vector<64x32xbf16>
    %27 = arith.index_cast %9 : i32 to index
    %c8 = arith.constant 8 : index
    %c0_12 = arith.constant 0 : index
    %28 = vector.load %arg7[%27, %c8, %c0_12] : memref<2x72x32xbf16, #tpu.memory_space<vmem>>, vector<1x64x32xbf16>
    %29 = vector.shape_cast %28 : vector<1x64x32xbf16> to vector<64x32xbf16>
    %c0_13 = arith.constant 0 : index
    %c0_14 = arith.constant 0 : index
    %c0_15 = arith.constant 0 : index
    %30 = vector.load %arg3[%c0_13, %c0_14, %c0_15] : memref<2x32x128xbf16, #tpu.memory_space<vmem>>, vector<1x32x128xbf16>
    %31 = vector.shape_cast %30 : vector<1x32x128xbf16> to vector<32x128xbf16>
    %cst = arith.constant dense<0.000000e+00> : vector<64x128xf32>
    %32 = tpu.matmul %26, %31, %cst {dimension_numbers = #tpu.dot_dimension_numbers<[1], [0], [0], [1], [0, 0, 1, 1], [], []>} : vector<64x32xbf16>, vector<32x128xbf16>, vector<64x128xf32> -> vector<64x128xf32>
    %c1 = arith.constant 1 : index
    %c0_16 = arith.constant 0 : index
    %c0_17 = arith.constant 0 : index
    %33 = vector.load %arg3[%c1, %c0_16, %c0_17] : memref<2x32x128xbf16, #tpu.memory_space<vmem>>, vector<1x32x128xbf16>
    %34 = vector.shape_cast %33 : vector<1x32x128xbf16> to vector<32x128xbf16>
    %cst_18 = arith.constant dense<0.000000e+00> : vector<64x128xf32>
    %35 = tpu.matmul %29, %34, %cst_18 {dimension_numbers = #tpu.dot_dimension_numbers<[1], [0], [0], [1], [0, 0, 1, 1], [], []>} : vector<64x32xbf16>, vector<32x128xbf16>, vector<64x128xf32> -> vector<64x128xf32>
    %36 = arith.addf %32, %35 : vector<64x128xf32>
    %37 = arith.truncf %36 : vector<64x128xf32> to vector<64x128xbf16>
    %38 = vector.shape_cast %37 : vector<64x128xbf16> to vector<1x64x128xbf16>
    %c0_19 = arith.constant 0 : index
    %c0_20 = arith.constant 0 : index
    %c0_21 = arith.constant 0 : index
    %39 = vector.load %arg4[%c0_19, %c0_20, %c0_21] : memref<1x64x128xbf16, #tpu.memory_space<vmem>>, vector<1x64x128xbf16>
    tpu.vector_store %arg4[%c0_19, %c0_20, %c0_21], %38 {strides = array<i32>} : memref<1x64x128xbf16, #tpu.memory_space<vmem>>, vector<1x64x128xbf16>,
    %cst_22 = arith.constant dense<0.000000e+00> : vector<128xf32>
    %40 = vector.multi_reduction <add>, %36, %cst_22 [0] : vector<64x128xf32> to vector<128xf32>
    %41 = vector.shape_cast %40 : vector<128xf32> to vector<1x1x128xf32>
    %c0_23 = arith.constant 0 : index
    %c0_24 = arith.constant 0 : index
    %c0_25 = arith.constant 0 : index
    %42 = vector.load %arg5[%c0_23, %c0_24, %c0_25] : memref<1x1x128xf32, #tpu.memory_space<vmem>>, vector<1x1x128xf32>
    tpu.vector_store %arg5[%c0_23, %c0_24, %c0_25], %41 {strides = array<i32>} : memref<1x1x128xf32, #tpu.memory_space<vmem>>, vector<1x1x128xf32>,
    %43 = arith.mulf %36, %36 : vector<64x128xf32>
    %cst_26 = arith.constant dense<0.000000e+00> : vector<128xf32>
    %44 = vector.multi_reduction <add>, %43, %cst_26 [0] : vector<64x128xf32> to vector<128xf32>
    %45 = vector.shape_cast %44 : vector<128xf32> to vector<1x1x128xf32>
    %c0_27 = arith.constant 0 : index
    %c0_28 = arith.constant 0 : index
    %c0_29 = arith.constant 0 : index
    %46 = vector.load %arg6[%c0_27, %c0_28, %c0_29] : memref<1x1x128xf32, #tpu.memory_space<vmem>>, vector<1x1x128xf32>
    tpu.vector_store %arg6[%c0_27, %c0_28, %c0_29], %45 {strides = array<i32>} : memref<1x1x128xf32, #tpu.memory_space<vmem>>, vector<1x1x128xf32>,
    return
  }
  func.func @transform_1(%arg0: i32, %arg1: i32) -> (i32, i32, i32) {
    %c0_i32 = arith.constant 0 : i32
    %c0_i32_0 = arith.constant 0 : i32
    %c0_i32_1 = arith.constant 0 : i32
    %c0_i32_2 = arith.constant 0 : i32
    return %c0_i32, %c0_i32_0, %c0_i32_1 : i32, i32, i32
  }
  func.func @transform_2(%arg0: i32, %arg1: i32) -> (i32, i32, i32) {
    %c0_i32 = arith.constant 0 : i32
    %c0_i32_0 = arith.constant 0 : i32
    return %arg0, %arg1, %c0_i32 : i32, i32, i32
  }
  func.func @transform_3(%arg0: i32, %arg1: i32) -> (i32, i32, i32) {
    %c1_i32 = arith.constant 1 : i32
    %0 = arith.muli %arg0, %c1_i32 : i32
    %1 = arith.addi %0, %arg1 : i32
    %c0_i32 = arith.constant 0 : i32
    %c0_i32_0 = arith.constant 0 : i32
    %c0_i32_1 = arith.constant 0 : i32
    return %1, %c0_i32, %c0_i32_0 : i32, i32, i32
  }
  func.func @transform_4(%arg0: i32, %arg1: i32) -> (i32, i32, i32) {
    %c1_i32 = arith.constant 1 : i32
    %0 = arith.muli %arg0, %c1_i32 : i32
    %1 = arith.addi %0, %arg1 : i32
    %c0_i32 = arith.constant 0 : i32
    %c0_i32_0 = arith.constant 0 : i32
    %c0_i32_1 = arith.constant 0 : i32
    return %1, %c0_i32, %c0_i32_0 : i32, i32, i32
  }
}

module attributes {stable_mosaic.version = 11 : i64} {
  func.func @_bn_lrelu_kernel(%arg0: i32, %arg1: memref<128x128xbf16, #tpu.memory_space<vmem>>, %arg2: memref<1x128xf32, #tpu.memory_space<vmem>>, %arg3: memref<1x128xf32, #tpu.memory_space<vmem>>, %arg4: memref<128x128xbf16, #tpu.memory_space<vmem>>) attributes {dimension_semantics = [#tpu.dimension_semantics<parallel>], iteration_bounds = array<i64: 1>, scalar_prefetch = 0 : i64, scratch_operands = 0 : i64, tpu.core_type = #tpu.core_type<tc>, window_params = [{transform_indices = @transform_0, window_bounds = array<i64: 128, 128>}, {pipeline_mode = #tpu.pipeline_mode<synchronous>, transform_indices = @transform_1, window_bounds = array<i64: 1, 128>}, {pipeline_mode = #tpu.pipeline_mode<synchronous>, transform_indices = @transform_2, window_bounds = array<i64: 1, 128>}, {transform_indices = @transform_3, window_bounds = array<i64: 128, 128>}]} {
    %c0 = arith.constant 0 : index
    %c0_0 = arith.constant 0 : index
    %0 = vector.load %arg1[%c0, %c0_0] : memref<128x128xbf16, #tpu.memory_space<vmem>>, vector<128x128xbf16>
    %1 = arith.extf %0 : vector<128x128xbf16> to vector<128x128xf32>
    %c0_1 = arith.constant 0 : index
    %c0_2 = arith.constant 0 : index
    %2 = vector.load %arg2[%c0_1, %c0_2] : memref<1x128xf32, #tpu.memory_space<vmem>>, vector<1x128xf32>
    %3 = vector.broadcast %2 : vector<1x128xf32> to vector<128x128xf32>
    %4 = arith.mulf %1, %3 : vector<128x128xf32>
    %c0_3 = arith.constant 0 : index
    %c0_4 = arith.constant 0 : index
    %5 = vector.load %arg3[%c0_3, %c0_4] : memref<1x128xf32, #tpu.memory_space<vmem>>, vector<1x128xf32>
    %6 = vector.broadcast %5 : vector<1x128xf32> to vector<128x128xf32>
    %7 = arith.addf %4, %6 : vector<128x128xf32>
    %cst = arith.constant 0.00999999977 : f32
    %8 = vector.broadcast %cst : f32 to vector<128x128xf32>
    %9 = arith.mulf %8, %7 : vector<128x128xf32>
    %10 = arith.maximumf %7, %9 : vector<128x128xf32>
    %11 = arith.truncf %10 : vector<128x128xf32> to vector<128x128xbf16>
    %c0_5 = arith.constant 0 : index
    %c0_6 = arith.constant 0 : index
    %12 = vector.load %arg4[%c0_5, %c0_6] : memref<128x128xbf16, #tpu.memory_space<vmem>>, vector<128x128xbf16>
    tpu.vector_store %arg4[%c0_5, %c0_6], %11 {strides = array<i32>} : memref<128x128xbf16, #tpu.memory_space<vmem>>, vector<128x128xbf16>,
    return
  }
  func.func @transform_0(%arg0: i32) -> (i32, i32) {
    %c0_i32 = arith.constant 0 : i32
    %c0_i32_0 = arith.constant 0 : i32
    return %arg0, %c0_i32 : i32, i32
  }
  func.func @transform_1(%arg0: i32) -> (i32, i32) {
    %c0_i32 = arith.constant 0 : i32
    %c0_i32_0 = arith.constant 0 : i32
    %c0_i32_1 = arith.constant 0 : i32
    return %c0_i32, %c0_i32_0 : i32, i32
  }
  func.func @transform_2(%arg0: i32) -> (i32, i32) {
    %c0_i32 = arith.constant 0 : i32
    %c0_i32_0 = arith.constant 0 : i32
    %c0_i32_1 = arith.constant 0 : i32
    return %c0_i32, %c0_i32_0 : i32, i32
  }
  func.func @transform_3(%arg0: i32) -> (i32, i32) {
    %c0_i32 = arith.constant 0 : i32
    %c0_i32_0 = arith.constant 0 : i32
    return %arg0, %c0_i32 : i32, i32
  }
}

module attributes {stable_mosaic.version = 11 : i64} {
  func.func @kernel(%arg0: i32, %arg1: i32, %arg2: memref<2x20x1024xbf16, #tpu.memory_space<any>>, %arg3: memref<2x1024x128xbf16, #tpu.memory_space<vmem>>, %arg4: memref<1x16x128xbf16, #tpu.memory_space<vmem>>, %arg5: memref<1x1x128xf32, #tpu.memory_space<vmem>>, %arg6: memref<1x1x128xf32, #tpu.memory_space<vmem>>, %arg7: memref<2x20x1024xbf16, #tpu.memory_space<vmem>>, %arg8: memref<2x!tpu.dma_semaphore, #tpu.memory_space<semaphore_mem>>) attributes {dimension_semantics = [#tpu.dimension_semantics<parallel>, #tpu.dimension_semantics<arbitrary>], iteration_bounds = array<i64: 2, 1>, scalar_prefetch = 0 : i64, scratch_operands = 2 : i64, tpu.core_type = #tpu.core_type<tc>, window_params = [{}, {pipeline_mode = #tpu.pipeline_mode<synchronous>, transform_indices = @transform_1, window_bounds = array<i64: 2, 1024, 128>}, {transform_indices = @transform_2, window_bounds = array<i64: 1, 16, 128>}, {transform_indices = @transform_3, window_bounds = array<i64: 1, 1, 128>}, {transform_indices = @transform_4, window_bounds = array<i64: 1, 1, 128>}]} {
    %c2_i32 = arith.constant 2 : i32
    %c0_i32 = arith.constant 0 : i32
    %0 = arith.cmpi eq, %c2_i32, %c0_i32 : i32
    %c1_i32 = arith.constant 1 : i32
    %1 = arith.select %0, %c1_i32, %c2_i32 : i32
    %2 = arith.remsi %arg1, %1 : i32
    %c0_i32_0 = arith.constant 0 : i32
    %3 = arith.cmpi ne, %2, %c0_i32_0 : i32
    %c0_i32_1 = arith.constant 0 : i32
    %4 = arith.cmpi slt, %2, %c0_i32_1 : i32
    %c0_i32_2 = arith.constant 0 : i32
    %5 = arith.cmpi slt, %1, %c0_i32_2 : i32
    %6 = arith.xori %4, %5 : i1
    %7 = arith.andi %6, %3 : i1
    %8 = arith.addi %2, %1 : i32
    %9 = arith.select %7, %8, %2 : i32
    %c0_i32_3 = arith.constant 0 : i32
    %10 = arith.cmpi eq, %arg1, %c0_i32_3 : i32
    %11 = arith.extui %10 : i1 to i32
    %c0_i32_4 = arith.constant 0 : i32
    %12 = arith.cmpi ne, %11, %c0_i32_4 : i32
    scf.if %12 {
      %c0_i32_30 = arith.constant 0 : i32
      %c0_i32_31 = arith.constant 0 : i32
      %c0_i32_32 = arith.constant 0 : i32
      %c0_i32_33 = arith.constant 0 : i32
      %47 = tpu.memref_slice %arg2[%arg0, %c0_i32_32, %c0_i32_33] : memref<2x20x1024xbf16, #tpu.memory_space<any>> -> memref<1x20x1024xbf16, #tpu.memory_space<any>>
      %48 = tpu.memref_squeeze %47 : memref<1x20x1024xbf16, #tpu.memory_space<any>> -> memref<20x1024xbf16, #tpu.memory_space<any>>
      %c0_i32_34 = arith.constant 0 : i32
      %c0_i32_35 = arith.constant 0 : i32
      %49 = tpu.memref_slice %arg7[%c0_i32_30, %c0_i32_34, %c0_i32_35] : memref<2x20x1024xbf16, #tpu.memory_space<vmem>> -> memref<1x20x1024xbf16, #tpu.memory_space<vmem>>
      %50 = tpu.memref_squeeze %49 : memref<1x20x1024xbf16, #tpu.memory_space<vmem>> -> memref<20x1024xbf16, #tpu.memory_space<vmem>>
      %51 = tpu.memref_slice %arg8[%c0_i32_31] : memref<2x!tpu.dma_semaphore, #tpu.memory_space<semaphore_mem>> -> memref<1x!tpu.dma_semaphore, #tpu.memory_space<semaphore_mem>>
      %52 = tpu.memref_squeeze %51 : memref<1x!tpu.dma_semaphore, #tpu.memory_space<semaphore_mem>> -> memref<!tpu.dma_semaphore, #tpu.memory_space<semaphore_mem>>
      tpu.enqueue_dma source(%48 : memref<20x1024xbf16, #tpu.memory_space<any>>) target(%50 : memref<20x1024xbf16, #tpu.memory_space<vmem>>) target_semaphore(%52 : memref<!tpu.dma_semaphore, #tpu.memory_space<semaphore_mem>>)
    } else {
    }
    %c1_i32_5 = arith.constant 1 : i32
    %13 = arith.addi %arg1, %c1_i32_5 : i32
    %c1_i32_6 = arith.constant 1 : i32
    %14 = arith.cmpi slt, %13, %c1_i32_6 : i32
    %15 = arith.extui %14 : i1 to i32
    %c0_i32_7 = arith.constant 0 : i32
    %16 = arith.cmpi ne, %15, %c0_i32_7 : i32
    scf.if %16 {
      %c1_i32_30 = arith.constant 1 : i32
      %47 = arith.addi %arg1, %c1_i32_30 : i32
      %c16_i32_31 = arith.constant 16 : i32
      %48 = arith.muli %47, %c16_i32_31 : i32
      %c1_i32_32 = arith.constant 1 : i32
      %49 = arith.subi %c1_i32_32, %9 : i32
      %c1_i32_33 = arith.constant 1 : i32
      %50 = arith.subi %c1_i32_33, %9 : i32
      %c0_i32_34 = arith.constant 0 : i32
      %51 = tpu.memref_slice %arg2[%arg0, %48, %c0_i32_34] : memref<2x20x1024xbf16, #tpu.memory_space<any>> -> memref<1x20x1024xbf16, #tpu.memory_space<any>>
      %52 = tpu.memref_squeeze %51 : memref<1x20x1024xbf16, #tpu.memory_space<any>> -> memref<20x1024xbf16, #tpu.memory_space<any>>
      %c0_i32_35 = arith.constant 0 : i32
      %c0_i32_36 = arith.constant 0 : i32
      %53 = tpu.memref_slice %arg7[%49, %c0_i32_35, %c0_i32_36] : memref<2x20x1024xbf16, #tpu.memory_space<vmem>> -> memref<1x20x1024xbf16, #tpu.memory_space<vmem>>
      %54 = tpu.memref_squeeze %53 : memref<1x20x1024xbf16, #tpu.memory_space<vmem>> -> memref<20x1024xbf16, #tpu.memory_space<vmem>>
      %55 = tpu.memref_slice %arg8[%50] : memref<2x!tpu.dma_semaphore, #tpu.memory_space<semaphore_mem>> -> memref<1x!tpu.dma_semaphore, #tpu.memory_space<semaphore_mem>>
      %56 = tpu.memref_squeeze %55 : memref<1x!tpu.dma_semaphore, #tpu.memory_space<semaphore_mem>> -> memref<!tpu.dma_semaphore, #tpu.memory_space<semaphore_mem>>
      tpu.enqueue_dma source(%52 : memref<20x1024xbf16, #tpu.memory_space<any>>) target(%54 : memref<20x1024xbf16, #tpu.memory_space<vmem>>) target_semaphore(%56 : memref<!tpu.dma_semaphore, #tpu.memory_space<semaphore_mem>>)
    } else {
    }
    %c16_i32 = arith.constant 16 : i32
    %17 = arith.muli %arg1, %c16_i32 : i32
    %c0_i32_8 = arith.constant 0 : i32
    %18 = tpu.memref_slice %arg2[%arg0, %17, %c0_i32_8] : memref<2x20x1024xbf16, #tpu.memory_space<any>> -> memref<1x20x1024xbf16, #tpu.memory_space<any>>
    %19 = tpu.memref_squeeze %18 : memref<1x20x1024xbf16, #tpu.memory_space<any>> -> memref<20x1024xbf16, #tpu.memory_space<any>>
    %c0_i32_9 = arith.constant 0 : i32
    %c0_i32_10 = arith.constant 0 : i32
    %20 = tpu.memref_slice %arg7[%9, %c0_i32_9, %c0_i32_10] : memref<2x20x1024xbf16, #tpu.memory_space<vmem>> -> memref<1x20x1024xbf16, #tpu.memory_space<vmem>>
    %21 = tpu.memref_squeeze %20 : memref<1x20x1024xbf16, #tpu.memory_space<vmem>> -> memref<20x1024xbf16, #tpu.memory_space<vmem>>
    %22 = tpu.memref_slice %arg8[%9] : memref<2x!tpu.dma_semaphore, #tpu.memory_space<semaphore_mem>> -> memref<1x!tpu.dma_semaphore, #tpu.memory_space<semaphore_mem>>
    %23 = tpu.memref_squeeze %22 : memref<1x!tpu.dma_semaphore, #tpu.memory_space<semaphore_mem>> -> memref<!tpu.dma_semaphore, #tpu.memory_space<semaphore_mem>>
    tpu.wait_dma2 semaphore(%23 : memref<!tpu.dma_semaphore, #tpu.memory_space<semaphore_mem>>) src(%19 : memref<20x1024xbf16, #tpu.memory_space<any>>) dst(%21 : memref<20x1024xbf16, #tpu.memory_space<vmem>>)
    %24 = arith.index_cast %9 : i32 to index
    %c0 = arith.constant 0 : index
    %c0_11 = arith.constant 0 : index
    %25 = vector.load %arg7[%24, %c0, %c0_11] : memref<2x20x1024xbf16, #tpu.memory_space<vmem>>, vector<1x16x1024xbf16>
    %26 = vector.shape_cast %25 : vector<1x16x1024xbf16> to vector<16x1024xbf16>
    %27 = arith.index_cast %9 : i32 to index
    %c4 = arith.constant 4 : index
    %c0_12 = arith.constant 0 : index
    %28 = vector.load %arg7[%27, %c4, %c0_12] : memref<2x20x1024xbf16, #tpu.memory_space<vmem>>, vector<1x16x1024xbf16>
    %29 = vector.shape_cast %28 : vector<1x16x1024xbf16> to vector<16x1024xbf16>
    %c0_13 = arith.constant 0 : index
    %c0_14 = arith.constant 0 : index
    %c0_15 = arith.constant 0 : index
    %30 = vector.load %arg3[%c0_13, %c0_14, %c0_15] : memref<2x1024x128xbf16, #tpu.memory_space<vmem>>, vector<1x1024x128xbf16>
    %31 = vector.shape_cast %30 : vector<1x1024x128xbf16> to vector<1024x128xbf16>
    %cst = arith.constant dense<0.000000e+00> : vector<16x128xf32>
    %32 = tpu.matmul %26, %31, %cst {dimension_numbers = #tpu.dot_dimension_numbers<[1], [0], [0], [1], [0, 0, 1, 1], [], []>} : vector<16x1024xbf16>, vector<1024x128xbf16>, vector<16x128xf32> -> vector<16x128xf32>
    %c1 = arith.constant 1 : index
    %c0_16 = arith.constant 0 : index
    %c0_17 = arith.constant 0 : index
    %33 = vector.load %arg3[%c1, %c0_16, %c0_17] : memref<2x1024x128xbf16, #tpu.memory_space<vmem>>, vector<1x1024x128xbf16>
    %34 = vector.shape_cast %33 : vector<1x1024x128xbf16> to vector<1024x128xbf16>
    %cst_18 = arith.constant dense<0.000000e+00> : vector<16x128xf32>
    %35 = tpu.matmul %29, %34, %cst_18 {dimension_numbers = #tpu.dot_dimension_numbers<[1], [0], [0], [1], [0, 0, 1, 1], [], []>} : vector<16x1024xbf16>, vector<1024x128xbf16>, vector<16x128xf32> -> vector<16x128xf32>
    %36 = arith.addf %32, %35 : vector<16x128xf32>
    %37 = arith.truncf %36 : vector<16x128xf32> to vector<16x128xbf16>
    %38 = vector.shape_cast %37 : vector<16x128xbf16> to vector<1x16x128xbf16>
    %c0_19 = arith.constant 0 : index
    %c0_20 = arith.constant 0 : index
    %c0_21 = arith.constant 0 : index
    %39 = vector.load %arg4[%c0_19, %c0_20, %c0_21] : memref<1x16x128xbf16, #tpu.memory_space<vmem>>, vector<1x16x128xbf16>
    tpu.vector_store %arg4[%c0_19, %c0_20, %c0_21], %38 {strides = array<i32>} : memref<1x16x128xbf16, #tpu.memory_space<vmem>>, vector<1x16x128xbf16>,
    %cst_22 = arith.constant dense<0.000000e+00> : vector<128xf32>
    %40 = vector.multi_reduction <add>, %36, %cst_22 [0] : vector<16x128xf32> to vector<128xf32>
    %41 = vector.shape_cast %40 : vector<128xf32> to vector<1x1x128xf32>
    %c0_23 = arith.constant 0 : index
    %c0_24 = arith.constant 0 : index
    %c0_25 = arith.constant 0 : index
    %42 = vector.load %arg5[%c0_23, %c0_24, %c0_25] : memref<1x1x128xf32, #tpu.memory_space<vmem>>, vector<1x1x128xf32>
    tpu.vector_store %arg5[%c0_23, %c0_24, %c0_25], %41 {strides = array<i32>} : memref<1x1x128xf32, #tpu.memory_space<vmem>>, vector<1x1x128xf32>,
    %43 = arith.mulf %36, %36 : vector<16x128xf32>
    %cst_26 = arith.constant dense<0.000000e+00> : vector<128xf32>
    %44 = vector.multi_reduction <add>, %43, %cst_26 [0] : vector<16x128xf32> to vector<128xf32>
    %45 = vector.shape_cast %44 : vector<128xf32> to vector<1x1x128xf32>
    %c0_27 = arith.constant 0 : index
    %c0_28 = arith.constant 0 : index
    %c0_29 = arith.constant 0 : index
    %46 = vector.load %arg6[%c0_27, %c0_28, %c0_29] : memref<1x1x128xf32, #tpu.memory_space<vmem>>, vector<1x1x128xf32>
    tpu.vector_store %arg6[%c0_27, %c0_28, %c0_29], %45 {strides = array<i32>} : memref<1x1x128xf32, #tpu.memory_space<vmem>>, vector<1x1x128xf32>,
    return
  }
  func.func @transform_1(%arg0: i32, %arg1: i32) -> (i32, i32, i32) {
    %c0_i32 = arith.constant 0 : i32
    %c0_i32_0 = arith.constant 0 : i32
    %c0_i32_1 = arith.constant 0 : i32
    %c0_i32_2 = arith.constant 0 : i32
    return %c0_i32, %c0_i32_0, %c0_i32_1 : i32, i32, i32
  }
  func.func @transform_2(%arg0: i32, %arg1: i32) -> (i32, i32, i32) {
    %c0_i32 = arith.constant 0 : i32
    %c0_i32_0 = arith.constant 0 : i32
    return %arg0, %arg1, %c0_i32 : i32, i32, i32
  }
  func.func @transform_3(%arg0: i32, %arg1: i32) -> (i32, i32, i32) {
    %c1_i32 = arith.constant 1 : i32
    %0 = arith.muli %arg0, %c1_i32 : i32
    %1 = arith.addi %0, %arg1 : i32
    %c0_i32 = arith.constant 0 : i32
    %c0_i32_0 = arith.constant 0 : i32
    %c0_i32_1 = arith.constant 0 : i32
    return %1, %c0_i32, %c0_i32_0 : i32, i32, i32
  }
  func.func @transform_4(%arg0: i32, %arg1: i32) -> (i32, i32, i32) {
    %c1_i32 = arith.constant 1 : i32
    %0 = arith.muli %arg0, %c1_i32 : i32
    %1 = arith.addi %0, %arg1 : i32
    %c0_i32 = arith.constant 0 : i32
    %c0_i32_0 = arith.constant 0 : i32
    %c0_i32_1 = arith.constant 0 : i32
    return %1, %c0_i32, %c0_i32_0 : i32, i32, i32
  }
}

module attributes {stable_mosaic.version = 11 : i64} {
  func.func @_bn_lrelu_kernel(%arg0: i32, %arg1: memref<32x128xbf16, #tpu.memory_space<vmem>>, %arg2: memref<1x128xf32, #tpu.memory_space<vmem>>, %arg3: memref<1x128xf32, #tpu.memory_space<vmem>>, %arg4: memref<32x128xbf16, #tpu.memory_space<vmem>>) attributes {dimension_semantics = [#tpu.dimension_semantics<parallel>], iteration_bounds = array<i64: 1>, scalar_prefetch = 0 : i64, scratch_operands = 0 : i64, tpu.core_type = #tpu.core_type<tc>, window_params = [{transform_indices = @transform_0, window_bounds = array<i64: 32, 128>}, {pipeline_mode = #tpu.pipeline_mode<synchronous>, transform_indices = @transform_1, window_bounds = array<i64: 1, 128>}, {pipeline_mode = #tpu.pipeline_mode<synchronous>, transform_indices = @transform_2, window_bounds = array<i64: 1, 128>}, {transform_indices = @transform_3, window_bounds = array<i64: 32, 128>}]} {
    %c0 = arith.constant 0 : index
    %c0_0 = arith.constant 0 : index
    %0 = vector.load %arg1[%c0, %c0_0] : memref<32x128xbf16, #tpu.memory_space<vmem>>, vector<32x128xbf16>
    %1 = arith.extf %0 : vector<32x128xbf16> to vector<32x128xf32>
    %c0_1 = arith.constant 0 : index
    %c0_2 = arith.constant 0 : index
    %2 = vector.load %arg2[%c0_1, %c0_2] : memref<1x128xf32, #tpu.memory_space<vmem>>, vector<1x128xf32>
    %3 = vector.broadcast %2 : vector<1x128xf32> to vector<32x128xf32>
    %4 = arith.mulf %1, %3 : vector<32x128xf32>
    %c0_3 = arith.constant 0 : index
    %c0_4 = arith.constant 0 : index
    %5 = vector.load %arg3[%c0_3, %c0_4] : memref<1x128xf32, #tpu.memory_space<vmem>>, vector<1x128xf32>
    %6 = vector.broadcast %5 : vector<1x128xf32> to vector<32x128xf32>
    %7 = arith.addf %4, %6 : vector<32x128xf32>
    %cst = arith.constant 0.00999999977 : f32
    %8 = vector.broadcast %cst : f32 to vector<32x128xf32>
    %9 = arith.mulf %8, %7 : vector<32x128xf32>
    %10 = arith.maximumf %7, %9 : vector<32x128xf32>
    %11 = arith.truncf %10 : vector<32x128xf32> to vector<32x128xbf16>
    %c0_5 = arith.constant 0 : index
    %c0_6 = arith.constant 0 : index
    %12 = vector.load %arg4[%c0_5, %c0_6] : memref<32x128xbf16, #tpu.memory_space<vmem>>, vector<32x128xbf16>
    tpu.vector_store %arg4[%c0_5, %c0_6], %11 {strides = array<i32>} : memref<32x128xbf16, #tpu.memory_space<vmem>>, vector<32x128xbf16>,
    return
  }
  func.func @transform_0(%arg0: i32) -> (i32, i32) {
    %c0_i32 = arith.constant 0 : i32
    %c0_i32_0 = arith.constant 0 : i32
    return %arg0, %c0_i32 : i32, i32
  }
  func.func @transform_1(%arg0: i32) -> (i32, i32) {
    %c0_i32 = arith.constant 0 : i32
    %c0_i32_0 = arith.constant 0 : i32
    %c0_i32_1 = arith.constant 0 : i32
    return %c0_i32, %c0_i32_0 : i32, i32
  }
  func.func @transform_2(%arg0: i32) -> (i32, i32) {
    %c0_i32 = arith.constant 0 : i32
    %c0_i32_0 = arith.constant 0 : i32
    %c0_i32_1 = arith.constant 0 : i32
    return %c0_i32, %c0_i32_0 : i32, i32
  }
  func.func @transform_3(%arg0: i32) -> (i32, i32) {
    %c0_i32 = arith.constant 0 : i32
    %c0_i32_0 = arith.constant 0 : i32
    return %arg0, %c0_i32 : i32, i32
  }
}

module attributes {stable_mosaic.version = 11 : i64} {
  func.func @_bn_lrelu_kernel(%arg0: i32, %arg1: memref<128x128xbf16, #tpu.memory_space<vmem>>, %arg2: memref<1x128xf32, #tpu.memory_space<vmem>>, %arg3: memref<1x128xf32, #tpu.memory_space<vmem>>, %arg4: memref<128x128xbf16, #tpu.memory_space<vmem>>) attributes {dimension_semantics = [#tpu.dimension_semantics<parallel>], iteration_bounds = array<i64: 1>, scalar_prefetch = 0 : i64, scratch_operands = 0 : i64, tpu.core_type = #tpu.core_type<tc>, window_params = [{transform_indices = @transform_0, window_bounds = array<i64: 128, 128>}, {pipeline_mode = #tpu.pipeline_mode<synchronous>, transform_indices = @transform_1, window_bounds = array<i64: 1, 128>}, {pipeline_mode = #tpu.pipeline_mode<synchronous>, transform_indices = @transform_2, window_bounds = array<i64: 1, 128>}, {transform_indices = @transform_3, window_bounds = array<i64: 128, 128>}]} {
    %c0 = arith.constant 0 : index
    %c0_0 = arith.constant 0 : index
    %0 = vector.load %arg1[%c0, %c0_0] : memref<128x128xbf16, #tpu.memory_space<vmem>>, vector<128x128xbf16>
    %1 = arith.extf %0 : vector<128x128xbf16> to vector<128x128xf32>
    %c0_1 = arith.constant 0 : index
    %c0_2 = arith.constant 0 : index
    %2 = vector.load %arg2[%c0_1, %c0_2] : memref<1x128xf32, #tpu.memory_space<vmem>>, vector<1x128xf32>
    %3 = vector.broadcast %2 : vector<1x128xf32> to vector<128x128xf32>
    %4 = arith.mulf %1, %3 : vector<128x128xf32>
    %c0_3 = arith.constant 0 : index
    %c0_4 = arith.constant 0 : index
    %5 = vector.load %arg3[%c0_3, %c0_4] : memref<1x128xf32, #tpu.memory_space<vmem>>, vector<1x128xf32>
    %6 = vector.broadcast %5 : vector<1x128xf32> to vector<128x128xf32>
    %7 = arith.addf %4, %6 : vector<128x128xf32>
    %cst = arith.constant 0.00999999977 : f32
    %8 = vector.broadcast %cst : f32 to vector<128x128xf32>
    %9 = arith.mulf %8, %7 : vector<128x128xf32>
    %10 = arith.maximumf %7, %9 : vector<128x128xf32>
    %11 = arith.truncf %10 : vector<128x128xf32> to vector<128x128xbf16>
    %c0_5 = arith.constant 0 : index
    %c0_6 = arith.constant 0 : index
    %12 = vector.load %arg4[%c0_5, %c0_6] : memref<128x128xbf16, #tpu.memory_space<vmem>>, vector<128x128xbf16>
    tpu.vector_store %arg4[%c0_5, %c0_6], %11 {strides = array<i32>} : memref<128x128xbf16, #tpu.memory_space<vmem>>, vector<128x128xbf16>,
    return
  }
  func.func @transform_0(%arg0: i32) -> (i32, i32) {
    %c0_i32 = arith.constant 0 : i32
    %c0_i32_0 = arith.constant 0 : i32
    return %arg0, %c0_i32 : i32, i32
  }
  func.func @transform_1(%arg0: i32) -> (i32, i32) {
    %c0_i32 = arith.constant 0 : i32
    %c0_i32_0 = arith.constant 0 : i32
    %c0_i32_1 = arith.constant 0 : i32
    return %c0_i32, %c0_i32_0 : i32, i32
  }
  func.func @transform_2(%arg0: i32) -> (i32, i32) {
    %c0_i32 = arith.constant 0 : i32
    %c0_i32_0 = arith.constant 0 : i32
    %c0_i32_1 = arith.constant 0 : i32
    return %c0_i32, %c0_i32_0 : i32, i32
  }
  func.func @transform_3(%arg0: i32) -> (i32, i32) {
    %c0_i32 = arith.constant 0 : i32
    %c0_i32_0 = arith.constant 0 : i32
    return %arg0, %c0_i32 : i32, i32
  }
}

module attributes {stable_mosaic.version = 11 : i64} {
  func.func @_matmul_stats_kernel(%arg0: i32, %arg1: memref<128x64xbf16, #tpu.memory_space<vmem>>, %arg2: memref<64x128xbf16, #tpu.memory_space<vmem>>, %arg3: memref<128x128xbf16, #tpu.memory_space<vmem>>, %arg4: memref<1x1x128xf32, #tpu.memory_space<vmem>>, %arg5: memref<1x1x128xf32, #tpu.memory_space<vmem>>) attributes {dimension_semantics = [#tpu.dimension_semantics<parallel>], iteration_bounds = array<i64: 1>, scalar_prefetch = 0 : i64, scratch_operands = 0 : i64, tpu.core_type = #tpu.core_type<tc>, window_params = [{transform_indices = @transform_0, window_bounds = array<i64: 128, 64>}, {pipeline_mode = #tpu.pipeline_mode<synchronous>, transform_indices = @transform_1, window_bounds = array<i64: 64, 128>}, {transform_indices = @transform_2, window_bounds = array<i64: 128, 128>}, {transform_indices = @transform_3, window_bounds = array<i64: 1, 1, 128>}, {transform_indices = @transform_4, window_bounds = array<i64: 1, 1, 128>}]} {
    %c0 = arith.constant 0 : index
    %c0_0 = arith.constant 0 : index
    %0 = vector.load %arg1[%c0, %c0_0] : memref<128x64xbf16, #tpu.memory_space<vmem>>, vector<128x64xbf16>
    %c0_1 = arith.constant 0 : index
    %c0_2 = arith.constant 0 : index
    %1 = vector.load %arg2[%c0_1, %c0_2] : memref<64x128xbf16, #tpu.memory_space<vmem>>, vector<64x128xbf16>
    %cst = arith.constant dense<0.000000e+00> : vector<128x128xf32>
    %2 = tpu.matmul %0, %1, %cst {dimension_numbers = #tpu.dot_dimension_numbers<[1], [0], [0], [1], [0, 0, 1, 1], [], []>} : vector<128x64xbf16>, vector<64x128xbf16>, vector<128x128xf32> -> vector<128x128xf32>
    %3 = arith.truncf %2 : vector<128x128xf32> to vector<128x128xbf16>
    %c0_3 = arith.constant 0 : index
    %c0_4 = arith.constant 0 : index
    %4 = vector.load %arg3[%c0_3, %c0_4] : memref<128x128xbf16, #tpu.memory_space<vmem>>, vector<128x128xbf16>
    tpu.vector_store %arg3[%c0_3, %c0_4], %3 {strides = array<i32>} : memref<128x128xbf16, #tpu.memory_space<vmem>>, vector<128x128xbf16>,
    %cst_5 = arith.constant dense<0.000000e+00> : vector<128xf32>
    %5 = vector.multi_reduction <add>, %2, %cst_5 [0] : vector<128x128xf32> to vector<128xf32>
    %6 = vector.shape_cast %5 : vector<128xf32> to vector<1x128xf32>
    %7 = vector.shape_cast %6 : vector<1x128xf32> to vector<1x1x128xf32>
    %c0_6 = arith.constant 0 : index
    %c0_7 = arith.constant 0 : index
    %c0_8 = arith.constant 0 : index
    %8 = vector.load %arg4[%c0_6, %c0_7, %c0_8] : memref<1x1x128xf32, #tpu.memory_space<vmem>>, vector<1x1x128xf32>
    tpu.vector_store %arg4[%c0_6, %c0_7, %c0_8], %7 {strides = array<i32>} : memref<1x1x128xf32, #tpu.memory_space<vmem>>, vector<1x1x128xf32>,
    %9 = arith.mulf %2, %2 : vector<128x128xf32>
    %cst_9 = arith.constant dense<0.000000e+00> : vector<128xf32>
    %10 = vector.multi_reduction <add>, %9, %cst_9 [0] : vector<128x128xf32> to vector<128xf32>
    %11 = vector.shape_cast %10 : vector<128xf32> to vector<1x128xf32>
    %12 = vector.shape_cast %11 : vector<1x128xf32> to vector<1x1x128xf32>
    %c0_10 = arith.constant 0 : index
    %c0_11 = arith.constant 0 : index
    %c0_12 = arith.constant 0 : index
    %13 = vector.load %arg5[%c0_10, %c0_11, %c0_12] : memref<1x1x128xf32, #tpu.memory_space<vmem>>, vector<1x1x128xf32>
    tpu.vector_store %arg5[%c0_10, %c0_11, %c0_12], %12 {strides = array<i32>} : memref<1x1x128xf32, #tpu.memory_space<vmem>>, vector<1x1x128xf32>,
    return
  }
  func.func @transform_0(%arg0: i32) -> (i32, i32) {
    %c0_i32 = arith.constant 0 : i32
    %c0_i32_0 = arith.constant 0 : i32
    return %arg0, %c0_i32 : i32, i32
  }
  func.func @transform_1(%arg0: i32) -> (i32, i32) {
    %c0_i32 = arith.constant 0 : i32
    %c0_i32_0 = arith.constant 0 : i32
    %c0_i32_1 = arith.constant 0 : i32
    return %c0_i32, %c0_i32_0 : i32, i32
  }
  func.func @transform_2(%arg0: i32) -> (i32, i32) {
    %c0_i32 = arith.constant 0 : i32
    %c0_i32_0 = arith.constant 0 : i32
    return %arg0, %c0_i32 : i32, i32
  }
  func.func @transform_3(%arg0: i32) -> (i32, i32, i32) {
    %c0_i32 = arith.constant 0 : i32
    %c0_i32_0 = arith.constant 0 : i32
    %c0_i32_1 = arith.constant 0 : i32
    return %arg0, %c0_i32, %c0_i32_0 : i32, i32, i32
  }
  func.func @transform_4(%arg0: i32) -> (i32, i32, i32) {
    %c0_i32 = arith.constant 0 : i32
    %c0_i32_0 = arith.constant 0 : i32
    %c0_i32_1 = arith.constant 0 : i32
    return %arg0, %c0_i32, %c0_i32_0 : i32, i32, i32
  }
}

module attributes {stable_mosaic.version = 11 : i64} {
  func.func @_matmul_stats_kernel(%arg0: i32, %arg1: memref<32x2048xbf16, #tpu.memory_space<vmem>>, %arg2: memref<2048x128xbf16, #tpu.memory_space<vmem>>, %arg3: memref<32x128xbf16, #tpu.memory_space<vmem>>, %arg4: memref<1x1x128xf32, #tpu.memory_space<vmem>>, %arg5: memref<1x1x128xf32, #tpu.memory_space<vmem>>) attributes {dimension_semantics = [#tpu.dimension_semantics<parallel>], iteration_bounds = array<i64: 1>, scalar_prefetch = 0 : i64, scratch_operands = 0 : i64, tpu.core_type = #tpu.core_type<tc>, window_params = [{transform_indices = @transform_0, window_bounds = array<i64: 32, 2048>}, {pipeline_mode = #tpu.pipeline_mode<synchronous>, transform_indices = @transform_1, window_bounds = array<i64: 2048, 128>}, {transform_indices = @transform_2, window_bounds = array<i64: 32, 128>}, {transform_indices = @transform_3, window_bounds = array<i64: 1, 1, 128>}, {transform_indices = @transform_4, window_bounds = array<i64: 1, 1, 128>}]} {
    %c0 = arith.constant 0 : index
    %c0_0 = arith.constant 0 : index
    %0 = vector.load %arg1[%c0, %c0_0] : memref<32x2048xbf16, #tpu.memory_space<vmem>>, vector<32x2048xbf16>
    %c0_1 = arith.constant 0 : index
    %c0_2 = arith.constant 0 : index
    %1 = vector.load %arg2[%c0_1, %c0_2] : memref<2048x128xbf16, #tpu.memory_space<vmem>>, vector<2048x128xbf16>
    %cst = arith.constant dense<0.000000e+00> : vector<32x128xf32>
    %2 = tpu.matmul %0, %1, %cst {dimension_numbers = #tpu.dot_dimension_numbers<[1], [0], [0], [1], [0, 0, 1, 1], [], []>} : vector<32x2048xbf16>, vector<2048x128xbf16>, vector<32x128xf32> -> vector<32x128xf32>
    %3 = arith.truncf %2 : vector<32x128xf32> to vector<32x128xbf16>
    %c0_3 = arith.constant 0 : index
    %c0_4 = arith.constant 0 : index
    %4 = vector.load %arg3[%c0_3, %c0_4] : memref<32x128xbf16, #tpu.memory_space<vmem>>, vector<32x128xbf16>
    tpu.vector_store %arg3[%c0_3, %c0_4], %3 {strides = array<i32>} : memref<32x128xbf16, #tpu.memory_space<vmem>>, vector<32x128xbf16>,
    %cst_5 = arith.constant dense<0.000000e+00> : vector<128xf32>
    %5 = vector.multi_reduction <add>, %2, %cst_5 [0] : vector<32x128xf32> to vector<128xf32>
    %6 = vector.shape_cast %5 : vector<128xf32> to vector<1x128xf32>
    %7 = vector.shape_cast %6 : vector<1x128xf32> to vector<1x1x128xf32>
    %c0_6 = arith.constant 0 : index
    %c0_7 = arith.constant 0 : index
    %c0_8 = arith.constant 0 : index
    %8 = vector.load %arg4[%c0_6, %c0_7, %c0_8] : memref<1x1x128xf32, #tpu.memory_space<vmem>>, vector<1x1x128xf32>
    tpu.vector_store %arg4[%c0_6, %c0_7, %c0_8], %7 {strides = array<i32>} : memref<1x1x128xf32, #tpu.memory_space<vmem>>, vector<1x1x128xf32>,
    %9 = arith.mulf %2, %2 : vector<32x128xf32>
    %cst_9 = arith.constant dense<0.000000e+00> : vector<128xf32>
    %10 = vector.multi_reduction <add>, %9, %cst_9 [0] : vector<32x128xf32> to vector<128xf32>
    %11 = vector.shape_cast %10 : vector<128xf32> to vector<1x128xf32>
    %12 = vector.shape_cast %11 : vector<1x128xf32> to vector<1x1x128xf32>
    %c0_10 = arith.constant 0 : index
    %c0_11 = arith.constant 0 : index
    %c0_12 = arith.constant 0 : index
    %13 = vector.load %arg5[%c0_10, %c0_11, %c0_12] : memref<1x1x128xf32, #tpu.memory_space<vmem>>, vector<1x1x128xf32>
    tpu.vector_store %arg5[%c0_10, %c0_11, %c0_12], %12 {strides = array<i32>} : memref<1x1x128xf32, #tpu.memory_space<vmem>>, vector<1x1x128xf32>,
    return
  }
  func.func @transform_0(%arg0: i32) -> (i32, i32) {
    %c0_i32 = arith.constant 0 : i32
    %c0_i32_0 = arith.constant 0 : i32
    return %arg0, %c0_i32 : i32, i32
  }
  func.func @transform_1(%arg0: i32) -> (i32, i32) {
    %c0_i32 = arith.constant 0 : i32
    %c0_i32_0 = arith.constant 0 : i32
    %c0_i32_1 = arith.constant 0 : i32
    return %c0_i32, %c0_i32_0 : i32, i32
  }
  func.func @transform_2(%arg0: i32) -> (i32, i32) {
    %c0_i32 = arith.constant 0 : i32
    %c0_i32_0 = arith.constant 0 : i32
    return %arg0, %c0_i32 : i32, i32
  }
  func.func @transform_3(%arg0: i32) -> (i32, i32, i32) {
    %c0_i32 = arith.constant 0 : i32
    %c0_i32_0 = arith.constant 0 : i32
    %c0_i32_1 = arith.constant 0 : i32
    return %arg0, %c0_i32, %c0_i32_0 : i32, i32, i32
  }
  func.func @transform_4(%arg0: i32) -> (i32, i32, i32) {
    %c0_i32 = arith.constant 0 : i32
    %c0_i32_0 = arith.constant 0 : i32
    %c0_i32_1 = arith.constant 0 : i32
    return %arg0, %c0_i32, %c0_i32_0 : i32, i32, i32
  }
}

module attributes {stable_mosaic.version = 11 : i64} {
  func.func @_bn_lrelu_kernel(%arg0: i32, %arg1: memref<32x128xbf16, #tpu.memory_space<vmem>>, %arg2: memref<1x128xf32, #tpu.memory_space<vmem>>, %arg3: memref<1x128xf32, #tpu.memory_space<vmem>>, %arg4: memref<32x128xbf16, #tpu.memory_space<vmem>>) attributes {dimension_semantics = [#tpu.dimension_semantics<parallel>], iteration_bounds = array<i64: 1>, scalar_prefetch = 0 : i64, scratch_operands = 0 : i64, tpu.core_type = #tpu.core_type<tc>, window_params = [{transform_indices = @transform_0, window_bounds = array<i64: 32, 128>}, {pipeline_mode = #tpu.pipeline_mode<synchronous>, transform_indices = @transform_1, window_bounds = array<i64: 1, 128>}, {pipeline_mode = #tpu.pipeline_mode<synchronous>, transform_indices = @transform_2, window_bounds = array<i64: 1, 128>}, {transform_indices = @transform_3, window_bounds = array<i64: 32, 128>}]} {
    %c0 = arith.constant 0 : index
    %c0_0 = arith.constant 0 : index
    %0 = vector.load %arg1[%c0, %c0_0] : memref<32x128xbf16, #tpu.memory_space<vmem>>, vector<32x128xbf16>
    %1 = arith.extf %0 : vector<32x128xbf16> to vector<32x128xf32>
    %c0_1 = arith.constant 0 : index
    %c0_2 = arith.constant 0 : index
    %2 = vector.load %arg2[%c0_1, %c0_2] : memref<1x128xf32, #tpu.memory_space<vmem>>, vector<1x128xf32>
    %3 = vector.broadcast %2 : vector<1x128xf32> to vector<32x128xf32>
    %4 = arith.mulf %1, %3 : vector<32x128xf32>
    %c0_3 = arith.constant 0 : index
    %c0_4 = arith.constant 0 : index
    %5 = vector.load %arg3[%c0_3, %c0_4] : memref<1x128xf32, #tpu.memory_space<vmem>>, vector<1x128xf32>
    %6 = vector.broadcast %5 : vector<1x128xf32> to vector<32x128xf32>
    %7 = arith.addf %4, %6 : vector<32x128xf32>
    %cst = arith.constant 0.00999999977 : f32
    %8 = vector.broadcast %cst : f32 to vector<32x128xf32>
    %9 = arith.mulf %8, %7 : vector<32x128xf32>
    %10 = arith.maximumf %7, %9 : vector<32x128xf32>
    %11 = arith.truncf %10 : vector<32x128xf32> to vector<32x128xbf16>
    %c0_5 = arith.constant 0 : index
    %c0_6 = arith.constant 0 : index
    %12 = vector.load %arg4[%c0_5, %c0_6] : memref<32x128xbf16, #tpu.memory_space<vmem>>, vector<32x128xbf16>
    tpu.vector_store %arg4[%c0_5, %c0_6], %11 {strides = array<i32>} : memref<32x128xbf16, #tpu.memory_space<vmem>>, vector<32x128xbf16>,
    return
  }
  func.func @transform_0(%arg0: i32) -> (i32, i32) {
    %c0_i32 = arith.constant 0 : i32
    %c0_i32_0 = arith.constant 0 : i32
    return %arg0, %c0_i32 : i32, i32
  }
  func.func @transform_1(%arg0: i32) -> (i32, i32) {
    %c0_i32 = arith.constant 0 : i32
    %c0_i32_0 = arith.constant 0 : i32
    %c0_i32_1 = arith.constant 0 : i32
    return %c0_i32, %c0_i32_0 : i32, i32
  }
  func.func @transform_2(%arg0: i32) -> (i32, i32) {
    %c0_i32 = arith.constant 0 : i32
    %c0_i32_0 = arith.constant 0 : i32
    %c0_i32_1 = arith.constant 0 : i32
    return %c0_i32, %c0_i32_0 : i32, i32
  }
  func.func @transform_3(%arg0: i32) -> (i32, i32) {
    %c0_i32 = arith.constant 0 : i32
    %c0_i32_0 = arith.constant 0 : i32
    return %arg0, %c0_i32 : i32, i32
  }
}

</mosaic_0001>

<llo_original>
// kernel: discriminator_forward.5
$region0: #{discriminator_forward.5}
  #allocation0 [shape = 'u32[]', space=smem, size = 0x4, offset = 0x4, fixed_abs, tag = 'smem constant byte address 0x4 - core index']
  #allocation1 [shape = 'u32[72,128]{1,0:T(1,128)}', space=vmem, size = 0x9000, scoped, tag = 'internal scratch']
  %s0 = inlined_call_operand.vmem [shape: bf16[128,128], index: 0, kind: input, shape index: {}]
  %s1 = inlined_call_operand.vmem [shape: f32[1,128], index: 1, kind: input, shape index: {}]
  %s2 = inlined_call_operand.vmem [shape: f32[1,128], index: 2, kind: input, shape index: {}]
  %s3 = inlined_call_operand.vmem [shape: bf16[128,128], index: 3, kind: output, shape index: {}]
  %s4 = sld [smem:[#allocation0]]
  $region22: #{discriminator_forward.5} parent=0
    _
  %s6 = ssub.s32 1, %s4
  %s7 = scalar_select 0, %s6, %s4
  // Predicated region
  $region2: #{discriminator_forward.5} parent=0 // pred_check
    _
  $region3: #{discriminator_forward.5} parent=0 // pred_check_branch
    %9 = sbr.rel (0) target = $region5
  $region4: #{discriminator_forward.5} parent=0 // pred_region
    _
  $region5: #{discriminator_forward.5} parent=0 // pred_fallthru
    _
  // Predicated region
  $region6: #{discriminator_forward.5} parent=0 // pred_check
    _
  $region7: #{discriminator_forward.5} parent=0 // pred_check_branch
    %11 = sbr.rel (0) target = $region9
  $region8: #{discriminator_forward.5} parent=0 // pred_region
    _
  $region9: #{discriminator_forward.5} parent=0 // pred_fallthru
    _
  // Predicated region
  $region10: #{discriminator_forward.5} parent=0 // pred_check
    _
  $region11: #{discriminator_forward.5} parent=0 // pred_check_branch
    %13 = sbr.rel (0) target = $region13
  $region12: #{discriminator_forward.5} parent=0 // pred_region
    _
  $region13: #{discriminator_forward.5} parent=0 // pred_fallthru
    _
  %v14 = vld [vmem:[%s0] sm:$0xf]
  %v15 = vld [vmem:[%s0 + $0x4] sm:$0xf]
  %v16 = vld [vmem:[%s0 + $0x8] sm:$0xf]
  %v17 = vld [vmem:[%s0 + $0xc] sm:$0xf]
  %v18 = vld [vmem:[%s0 + $0x10] sm:$0xf]
  %v19 = vld [vmem:[%s0 + $0x14] sm:$0xf]
  %v20 = vld [vmem:[%s0 + $0x18] sm:$0xf]
  %v21 = vld [vmem:[%s0 + $0x1c] sm:$0xf]
  %v22 = vld [vmem:[%s0 + $0x20] sm:$0xf]
  %v23 = vld [vmem:[%s0 + $0x24] sm:$0xf]
  %v24 = vld [vmem:[%s0 + $0x28] sm:$0xf]
  %v25 = vld [vmem:[%s0 + $0x2c] sm:$0xf]
  %v26 = vld [vmem:[%s0 + $0x30] sm:$0xf]
  %v27 = vld [vmem:[%s0 + $0x34] sm:$0xf]
  %v28 = vld [vmem:[%s0 + $0x38] sm:$0xf]
  %v29 = vld [vmem:[%s0 + $0x3c] sm:$0xf]
  %v30 = vunpack.c.l.bf16 %v14
  %v31 = vunpack.c.l.bf16 %v15
  %v32 = vunpack.c.l.bf16 %v16
  %v33 = vunpack.c.l.bf16 %v17
  %v34 = vunpack.c.l.bf16 %v18
  %v35 = vunpack.c.l.bf16 %v19
  %v36 = vunpack.c.l.bf16 %v20
  %v37 = vunpack.c.l.bf16 %v21
  %v38 = vunpack.c.l.bf16 %v22
  %v39 = vunpack.c.l.bf16 %v23
  %v40 = vunpack.c.l.bf16 %v24
  %v41 = vunpack.c.l.bf16 %v25
  %v42 = vunpack.c.l.bf16 %v26
  %v43 = vunpack.c.l.bf16 %v27
  %v44 = vunpack.c.l.bf16 %v28
  %v45 = vunpack.c.l.bf16 %v29
  %v46 = vld [vmem:[%s1] sm:$0x1]
  %v48 = vperm.slane %v46, 0
  %v50 = vmul.f32 %v30, %v48
  %v51 = vmul.f32 %v31, %v48
  %v52 = vmul.f32 %v32, %v48
  %v53 = vmul.f32 %v33, %v48
  %v54 = vmul.f32 %v34, %v48
  %v55 = vmul.f32 %v35, %v48
  %v56 = vmul.f32 %v36, %v48
  %v57 = vmul.f32 %v37, %v48
  %v58 = vmul.f32 %v38, %v48
  %v59 = vmul.f32 %v39, %v48
  %v60 = vmul.f32 %v40, %v48
  %v61 = vmul.f32 %v41, %v48
  %v62 = vmul.f32 %v42, %v48
  %v63 = vmul.f32 %v43, %v48
  %v64 = vmul.f32 %v44, %v48
  %v65 = vmul.f32 %v45, %v48
  %v66 = vld [vmem:[%s2] sm:$0x1]
  %v68 = vperm.slane %v66, 0
  %v70 = vadd.f32 %v50, %v68
  %v71 = vadd.f32 %v51, %v68
  %v72 = vadd.f32 %v52, %v68
  %v73 = vadd.f32 %v53, %v68
  %v74 = vadd.f32 %v54, %v68
  %v75 = vadd.f32 %v55, %v68
  %v76 = vadd.f32 %v56, %v68
  %v77 = vadd.f32 %v57, %v68
  %v78 = vadd.f32 %v58, %v68
  %v79 = vadd.f32 %v59, %v68
  %v80 = vadd.f32 %v60, %v68
  %v81 = vadd.f32 %v61, %v68
  %v82 = vadd.f32 %v62, %v68
  %v83 = vadd.f32 %v63, %v68
  %v84 = vadd.f32 %v64, %v68
  %v85 = vadd.f32 %v65, %v68
  %v86 = vmul.f32 %v70, 0.01
  %v87 = vmul.f32 %v71, 0.01
  %v88 = vmul.f32 %v72, 0.01
  %v89 = vmul.f32 %v73, 0.01
  %v90 = vmul.f32 %v74, 0.01
  %v91 = vmul.f32 %v75, 0.01
  %v92 = vmul.f32 %v76, 0.01
  %v93 = vmul.f32 %v77, 0.01
  %v94 = vmul.f32 %v78, 0.01
  %v95 = vmul.f32 %v79, 0.01
  %v96 = vmul.f32 %v80, 0.01
  %v97 = vmul.f32 %v81, 0.01
  %v98 = vmul.f32 %v82, 0.01
  %v99 = vmul.f32 %v83, 0.01
  %v100 = vmul.f32 %v84, 0.01
  %v101 = vmul.f32 %v85, 0.01
  %v102 = vmax.f32 %v70, %v86
  %v103 = vmax.f32 %v71, %v87
  %v104 = vmax.f32 %v72, %v88
  %v105 = vmax.f32 %v73, %v89
  %v106 = vmax.f32 %v74, %v90
  %v107 = vmax.f32 %v75, %v91
  %v108 = vmax.f32 %v76, %v92
  %v109 = vmax.f32 %v77, %v93
  %v110 = vmax.f32 %v78, %v94
  %v111 = vmax.f32 %v79, %v95
  %v112 = vmax.f32 %v80, %v96
  %v113 = vmax.f32 %v81, %v97
  %v114 = vmax.f32 %v82, %v98
  %v115 = vmax.f32 %v83, %v99
  %v116 = vmax.f32 %v84, %v100
  %v117 = vmax.f32 %v85, %v101
  %v118 = vpack.c.bf16 %v102, %v102
  %v119 = vpack.c.bf16 %v103, %v103
  %v120 = vpack.c.bf16 %v104, %v104
  %v121 = vpack.c.bf16 %v105, %v105
  %v122 = vpack.c.bf16 %v106, %v106
  %v123 = vpack.c.bf16 %v107, %v107
  %v124 = vpack.c.bf16 %v108, %v108
  %v125 = vpack.c.bf16 %v109, %v109
  %v126 = vpack.c.bf16 %v110, %v110
  %v127 = vpack.c.bf16 %v111, %v111
  %v128 = vpack.c.bf16 %v112, %v112
  %v129 = vpack.c.bf16 %v113, %v113
  %v130 = vpack.c.bf16 %v114, %v114
  %v131 = vpack.c.bf16 %v115, %v115
  %v132 = vpack.c.bf16 %v116, %v116
  %v133 = vpack.c.bf16 %v117, %v117
  %134 = vst [vmem:[%s3] sm:$0xf] %v118
  %135 = vst [vmem:[%s3 + $0x4] sm:$0xf] %v119
  %136 = vst [vmem:[%s3 + $0x8] sm:$0xf] %v120
  %137 = vst [vmem:[%s3 + $0xc] sm:$0xf] %v121
  %138 = vst [vmem:[%s3 + $0x10] sm:$0xf] %v122
  %139 = vst [vmem:[%s3 + $0x14] sm:$0xf] %v123
  %140 = vst [vmem:[%s3 + $0x18] sm:$0xf] %v124
  %141 = vst [vmem:[%s3 + $0x1c] sm:$0xf] %v125
  %142 = vst [vmem:[%s3 + $0x20] sm:$0xf] %v126
  %143 = vst [vmem:[%s3 + $0x24] sm:$0xf] %v127
  %144 = vst [vmem:[%s3 + $0x28] sm:$0xf] %v128
  %145 = vst [vmem:[%s3 + $0x2c] sm:$0xf] %v129
  %146 = vst [vmem:[%s3 + $0x30] sm:$0xf] %v130
  %147 = vst [vmem:[%s3 + $0x34] sm:$0xf] %v131
  %148 = vst [vmem:[%s3 + $0x38] sm:$0xf] %v132
  %149 = vst [vmem:[%s3 + $0x3c] sm:$0xf] %v133
  // Predicated region
  $region14: #{discriminator_forward.5} parent=0 // pred_check
    _
  $region15: #{discriminator_forward.5} parent=0 // pred_check_branch
    %151 = sbr.rel (0) target = $region17
  $region16: #{discriminator_forward.5} parent=0 // pred_region
    _
  $region17: #{discriminator_forward.5} parent=0 // pred_fallthru
    _
  // Predicated region
  $region18: #{discriminator_forward.5} parent=0 // pred_check
    _
  $region19: #{discriminator_forward.5} parent=0 // pred_check_branch
    %153 = sbr.rel (0) target = $region21
  $region20: #{discriminator_forward.5} parent=0 // pred_region
    _
  $region21: #{discriminator_forward.5} parent=0 // pred_fallthru
    _

// kernel: discriminator_forward.7
$region0: #{discriminator_forward.7}
  #allocation0 [shape = 'u32[]', space=smem, size = 0x4, offset = 0x4, fixed_abs, tag = 'smem constant byte address 0x4 - core index']
  #allocation1 [shape = 'u32[72,128]{1,0:T(1,128)}', space=vmem, size = 0x9000, scoped, tag = 'internal scratch']
  %s0 = inlined_call_operand.vmem [shape: bf16[32,128], index: 0, kind: input, shape index: {}]
  %s1 = inlined_call_operand.vmem [shape: f32[1,128], index: 1, kind: input, shape index: {}]
  %s2 = inlined_call_operand.vmem [shape: f32[1,128], index: 2, kind: input, shape index: {}]
  %s3 = inlined_call_operand.vmem [shape: bf16[32,128], index: 3, kind: output, shape index: {}]
  %s4 = sld [smem:[#allocation0]]
  $region22: #{discriminator_forward.7} parent=0
    _
  %s6 = ssub.s32 1, %s4
  %s7 = scalar_select 0, %s6, %s4
  // Predicated region
  $region2: #{discriminator_forward.7} parent=0 // pred_check
    _
  $region3: #{discriminator_forward.7} parent=0 // pred_check_branch
    %9 = sbr.rel (0) target = $region5
  $region4: #{discriminator_forward.7} parent=0 // pred_region
    _
  $region5: #{discriminator_forward.7} parent=0 // pred_fallthru
    _
  // Predicated region
  $region6: #{discriminator_forward.7} parent=0 // pred_check
    _
  $region7: #{discriminator_forward.7} parent=0 // pred_check_branch
    %11 = sbr.rel (0) target = $region9
  $region8: #{discriminator_forward.7} parent=0 // pred_region
    _
  $region9: #{discriminator_forward.7} parent=0 // pred_fallthru
    _
  // Predicated region
  $region10: #{discriminator_forward.7} parent=0 // pred_check
    _
  $region11: #{discriminator_forward.7} parent=0 // pred_check_branch
    %13 = sbr.rel (0) target = $region13
  $region12: #{discriminator_forward.7} parent=0 // pred_region
    _
  $region13: #{discriminator_forward.7} parent=0 // pred_fallthru
    _
  %v14 = vld [vmem:[%s0] sm:$0xf]
  %v15 = vld [vmem:[%s0 + $0x4] sm:$0xf]
  %v16 = vld [vmem:[%s0 + $0x8] sm:$0xf]
  %v17 = vld [vmem:[%s0 + $0xc] sm:$0xf]
  %v18 = vunpack.c.l.bf16 %v14
  %v19 = vunpack.c.l.bf16 %v15
  %v20 = vunpack.c.l.bf16 %v16
  %v21 = vunpack.c.l.bf16 %v17
  %v22 = vld [vmem:[%s1] sm:$0x1]
  %v24 = vperm.slane %v22, 0
  %v26 = vmul.f32 %v18, %v24
  %v27 = vmul.f32 %v19, %v24
  %v28 = vmul.f32 %v20, %v24
  %v29 = vmul.f32 %v21, %v24
  %v30 = vld [vmem:[%s2] sm:$0x1]
  %v32 = vperm.slane %v30, 0
  %v34 = vadd.f32 %v26, %v32
  %v35 = vadd.f32 %v27, %v32
  %v36 = vadd.f32 %v28, %v32
  %v37 = vadd.f32 %v29, %v32
  %v38 = vmul.f32 %v34, 0.01
  %v39 = vmul.f32 %v35, 0.01
  %v40 = vmul.f32 %v36, 0.01
  %v41 = vmul.f32 %v37, 0.01
  %v42 = vmax.f32 %v34, %v38
  %v43 = vmax.f32 %v35, %v39
  %v44 = vmax.f32 %v36, %v40
  %v45 = vmax.f32 %v37, %v41
  %v46 = vpack.c.bf16 %v42, %v42
  %v47 = vpack.c.bf16 %v43, %v43
  %v48 = vpack.c.bf16 %v44, %v44
  %v49 = vpack.c.bf16 %v45, %v45
  %50 = vst [vmem:[%s3] sm:$0xf] %v46
  %51 = vst [vmem:[%s3 + $0x4] sm:$0xf] %v47
  %52 = vst [vmem:[%s3 + $0x8] sm:$0xf] %v48
  %53 = vst [vmem:[%s3 + $0xc] sm:$0xf] %v49
  // Predicated region
  $region14: #{discriminator_forward.7} parent=0 // pred_check
    _
  $region15: #{discriminator_forward.7} parent=0 // pred_check_branch
    %55 = sbr.rel (0) target = $region17
  $region16: #{discriminator_forward.7} parent=0 // pred_region
    _
  $region17: #{discriminator_forward.7} parent=0 // pred_fallthru
    _
  // Predicated region
  $region18: #{discriminator_forward.7} parent=0 // pred_check
    _
  $region19: #{discriminator_forward.7} parent=0 // pred_check_branch
    %57 = sbr.rel (0) target = $region21
  $region20: #{discriminator_forward.7} parent=0 // pred_region
    _
  $region21: #{discriminator_forward.7} parent=0 // pred_fallthru
    _

// kernel: discriminator_forward.5
$region0: #{discriminator_forward.5}
  #allocation0 [shape = 'u32[]', space=smem, size = 0x4, offset = 0x4, fixed_abs, tag = 'smem constant byte address 0x4 - core index']
  #allocation1 [shape = 'u32[72,128]{1,0:T(1,128)}', space=vmem, size = 0x9000, scoped, tag = 'internal scratch']
  %s0 = inlined_call_operand.vmem [shape: bf16[128,128], index: 0, kind: input, shape index: {}]
  %s1 = inlined_call_operand.vmem [shape: f32[1,128], index: 1, kind: input, shape index: {}]
  %s2 = inlined_call_operand.vmem [shape: f32[1,128], index: 2, kind: input, shape index: {}]
  %s3 = inlined_call_operand.vmem [shape: bf16[128,128], index: 3, kind: output, shape index: {}]
  %s4 = sld [smem:[#allocation0]]
  $region22: #{discriminator_forward.5} parent=0
    _
  %s6 = ssub.s32 1, %s4
  %s7 = scalar_select 0, %s6, %s4
  // Predicated region
  $region2: #{discriminator_forward.5} parent=0 // pred_check
    _
  $region3: #{discriminator_forward.5} parent=0 // pred_check_branch
    %9 = sbr.rel (0) target = $region5
  $region4: #{discriminator_forward.5} parent=0 // pred_region
    _
  $region5: #{discriminator_forward.5} parent=0 // pred_fallthru
    _
  // Predicated region
  $region6: #{discriminator_forward.5} parent=0 // pred_check
    _
  $region7: #{discriminator_forward.5} parent=0 // pred_check_branch
    %11 = sbr.rel (0) target = $region9
  $region8: #{discriminator_forward.5} parent=0 // pred_region
    _
  $region9: #{discriminator_forward.5} parent=0 // pred_fallthru
    _
  // Predicated region
  $region10: #{discriminator_forward.5} parent=0 // pred_check
    _
  $region11: #{discriminator_forward.5} parent=0 // pred_check_branch
    %13 = sbr.rel (0) target = $region13
  $region12: #{discriminator_forward.5} parent=0 // pred_region
    _
  $region13: #{discriminator_forward.5} parent=0 // pred_fallthru
    _
  %v14 = vld [vmem:[%s0] sm:$0xf]
  %v15 = vld [vmem:[%s0 + $0x4] sm:$0xf]
  %v16 = vld [vmem:[%s0 + $0x8] sm:$0xf]
  %v17 = vld [vmem:[%s0 + $0xc] sm:$0xf]
  %v18 = vld [vmem:[%s0 + $0x10] sm:$0xf]
  %v19 = vld [vmem:[%s0 + $0x14] sm:$0xf]
  %v20 = vld [vmem:[%s0 + $0x18] sm:$0xf]
  %v21 = vld [vmem:[%s0 + $0x1c] sm:$0xf]
  %v22 = vld [vmem:[%s0 + $0x20] sm:$0xf]
  %v23 = vld [vmem:[%s0 + $0x24] sm:$0xf]
  %v24 = vld [vmem:[%s0 + $0x28] sm:$0xf]
  %v25 = vld [vmem:[%s0 + $0x2c] sm:$0xf]
  %v26 = vld [vmem:[%s0 + $0x30] sm:$0xf]
  %v27 = vld [vmem:[%s0 + $0x34] sm:$0xf]
  %v28 = vld [vmem:[%s0 + $0x38] sm:$0xf]
  %v29 = vld [vmem:[%s0 + $0x3c] sm:$0xf]
  %v30 = vunpack.c.l.bf16 %v14
  %v31 = vunpack.c.l.bf16 %v15
  %v32 = vunpack.c.l.bf16 %v16
  %v33 = vunpack.c.l.bf16 %v17
  %v34 = vunpack.c.l.bf16 %v18
  %v35 = vunpack.c.l.bf16 %v19
  %v36 = vunpack.c.l.bf16 %v20
  %v37 = vunpack.c.l.bf16 %v21
  %v38 = vunpack.c.l.bf16 %v22
  %v39 = vunpack.c.l.bf16 %v23
  %v40 = vunpack.c.l.bf16 %v24
  %v41 = vunpack.c.l.bf16 %v25
  %v42 = vunpack.c.l.bf16 %v26
  %v43 = vunpack.c.l.bf16 %v27
  %v44 = vunpack.c.l.bf16 %v28
  %v45 = vunpack.c.l.bf16 %v29
  %v46 = vld [vmem:[%s1] sm:$0x1]
  %v48 = vperm.slane %v46, 0
  %v50 = vmul.f32 %v30, %v48
  %v51 = vmul.f32 %v31, %v48
  %v52 = vmul.f32 %v32, %v48
  %v53 = vmul.f32 %v33, %v48
  %v54 = vmul.f32 %v34, %v48
  %v55 = vmul.f32 %v35, %v48
  %v56 = vmul.f32 %v36, %v48
  %v57 = vmul.f32 %v37, %v48
  %v58 = vmul.f32 %v38, %v48
  %v59 = vmul.f32 %v39, %v48
  %v60 = vmul.f32 %v40, %v48
  %v61 = vmul.f32 %v41, %v48
  %v62 = vmul.f32 %v42, %v48
  %v63 = vmul.f32 %v43, %v48
  %v64 = vmul.f32 %v44, %v48
  %v65 = vmul.f32 %v45, %v48
  %v66 = vld [vmem:[%s2] sm:$0x1]
  %v68 = vperm.slane %v66, 0
  %v70 = vadd.f32 %v50, %v68
  %v71 = vadd.f32 %v51, %v68
  %v72 = vadd.f32 %v52, %v68
  %v73 = vadd.f32 %v53, %v68
  %v74 = vadd.f32 %v54, %v68
  %v75 = vadd.f32 %v55, %v68
  %v76 = vadd.f32 %v56, %v68
  %v77 = vadd.f32 %v57, %v68
  %v78 = vadd.f32 %v58, %v68
  %v79 = vadd.f32 %v59, %v68
  %v80 = vadd.f32 %v60, %v68
  %v81 = vadd.f32 %v61, %v68
  %v82 = vadd.f32 %v62, %v68
  %v83 = vadd.f32 %v63, %v68
  %v84 = vadd.f32 %v64, %v68
  %v85 = vadd.f32 %v65, %v68
  %v86 = vmul.f32 %v70, 0.01
  %v87 = vmul.f32 %v71, 0.01
  %v88 = vmul.f32 %v72, 0.01
  %v89 = vmul.f32 %v73, 0.01
  %v90 = vmul.f32 %v74, 0.01
  %v91 = vmul.f32 %v75, 0.01
  %v92 = vmul.f32 %v76, 0.01
  %v93 = vmul.f32 %v77, 0.01
  %v94 = vmul.f32 %v78, 0.01
  %v95 = vmul.f32 %v79, 0.01
  %v96 = vmul.f32 %v80, 0.01
  %v97 = vmul.f32 %v81, 0.01
  %v98 = vmul.f32 %v82, 0.01
  %v99 = vmul.f32 %v83, 0.01
  %v100 = vmul.f32 %v84, 0.01
  %v101 = vmul.f32 %v85, 0.01
  %v102 = vmax.f32 %v70, %v86
  %v103 = vmax.f32 %v71, %v87
  %v104 = vmax.f32 %v72, %v88
  %v105 = vmax.f32 %v73, %v89
  %v106 = vmax.f32 %v74, %v90
  %v107 = vmax.f32 %v75, %v91
  %v108 = vmax.f32 %v76, %v92
  %v109 = vmax.f32 %v77, %v93
  %v110 = vmax.f32 %v78, %v94
  %v111 = vmax.f32 %v79, %v95
  %v112 = vmax.f32 %v80, %v96
  %v113 = vmax.f32 %v81, %v97
  %v114 = vmax.f32 %v82, %v98
  %v115 = vmax.f32 %v83, %v99
  %v116 = vmax.f32 %v84, %v100
  %v117 = vmax.f32 %v85, %v101
  %v118 = vpack.c.bf16 %v102, %v102
  %v119 = vpack.c.bf16 %v103, %v103
  %v120 = vpack.c.bf16 %v104, %v104
  %v121 = vpack.c.bf16 %v105, %v105
  %v122 = vpack.c.bf16 %v106, %v106
  %v123 = vpack.c.bf16 %v107, %v107
  %v124 = vpack.c.bf16 %v108, %v108
  %v125 = vpack.c.bf16 %v109, %v109
  %v126 = vpack.c.bf16 %v110, %v110
  %v127 = vpack.c.bf16 %v111, %v111
  %v128 = vpack.c.bf16 %v112, %v112
  %v129 = vpack.c.bf16 %v113, %v113
  %v130 = vpack.c.bf16 %v114, %v114
  %v131 = vpack.c.bf16 %v115, %v115
  %v132 = vpack.c.bf16 %v116, %v116
  %v133 = vpack.c.bf16 %v117, %v117
  %134 = vst [vmem:[%s3] sm:$0xf] %v118
  %135 = vst [vmem:[%s3 + $0x4] sm:$0xf] %v119
  %136 = vst [vmem:[%s3 + $0x8] sm:$0xf] %v120
  %137 = vst [vmem:[%s3 + $0xc] sm:$0xf] %v121
  %138 = vst [vmem:[%s3 + $0x10] sm:$0xf] %v122
  %139 = vst [vmem:[%s3 + $0x14] sm:$0xf] %v123
  %140 = vst [vmem:[%s3 + $0x18] sm:$0xf] %v124
  %141 = vst [vmem:[%s3 + $0x1c] sm:$0xf] %v125
  %142 = vst [vmem:[%s3 + $0x20] sm:$0xf] %v126
  %143 = vst [vmem:[%s3 + $0x24] sm:$0xf] %v127
  %144 = vst [vmem:[%s3 + $0x28] sm:$0xf] %v128
  %145 = vst [vmem:[%s3 + $0x2c] sm:$0xf] %v129
  %146 = vst [vmem:[%s3 + $0x30] sm:$0xf] %v130
  %147 = vst [vmem:[%s3 + $0x34] sm:$0xf] %v131
  %148 = vst [vmem:[%s3 + $0x38] sm:$0xf] %v132
  %149 = vst [vmem:[%s3 + $0x3c] sm:$0xf] %v133
  // Predicated region
  $region14: #{discriminator_forward.5} parent=0 // pred_check
    _
  $region15: #{discriminator_forward.5} parent=0 // pred_check_branch
    %151 = sbr.rel (0) target = $region17
  $region16: #{discriminator_forward.5} parent=0 // pred_region
    _
  $region17: #{discriminator_forward.5} parent=0 // pred_fallthru
    _
  // Predicated region
  $region18: #{discriminator_forward.5} parent=0 // pred_check
    _
  $region19: #{discriminator_forward.5} parent=0 // pred_check_branch
    %153 = sbr.rel (0) target = $region21
  $region20: #{discriminator_forward.5} parent=0 // pred_region
    _
  $region21: #{discriminator_forward.5} parent=0 // pred_fallthru
    _

// kernel: discriminator_forward.4
$region0: #{discriminator_forward.4}
  #allocation0 [shape = 'u32[]', space=smem, size = 0x4, offset = 0x4, fixed_abs, tag = 'smem constant byte address 0x4 - core index']
  #allocation1 [shape = 'u32[72,128]{1,0:T(1,128)}', space=vmem, size = 0x9000, scoped, tag = 'internal scratch']
  %s0 = inlined_call_operand.vmem [shape: bf16[128,64], index: 0, kind: input, shape index: {}]
  %s1 = inlined_call_operand.vmem [shape: bf16[64,128], index: 1, kind: input, shape index: {}]
  %s2 = inlined_call_operand.vmem [shape: bf16[128,128], index: 2, kind: output, shape index: {0}]
  %s3 = inlined_call_operand.vmem [shape: f32[1,1,128], index: 3, kind: output, shape index: {1}]
  %s4 = inlined_call_operand.vmem [shape: f32[1,1,128], index: 4, kind: output, shape index: {2}]
  %5 = xla_tuple %s2, %s3, %s4
  %s6 = sld [smem:[#allocation0]]
  $region34: #{discriminator_forward.4} parent=0
    _
  %s8 = ssub.s32 1, %s6
  %s9 = scalar_select 0, %s8, %s6
  // Predicated region
  $region2: #{discriminator_forward.4} parent=0 // pred_check
    _
  $region3: #{discriminator_forward.4} parent=0 // pred_check_branch
    %11 = sbr.rel (0) target = $region5
  $region4: #{discriminator_forward.4} parent=0 // pred_region
    _
  $region5: #{discriminator_forward.4} parent=0 // pred_fallthru
    _
  // Predicated region
  $region6: #{discriminator_forward.4} parent=0 // pred_check
    _
  $region7: #{discriminator_forward.4} parent=0 // pred_check_branch
    %13 = sbr.rel (0) target = $region9
  $region8: #{discriminator_forward.4} parent=0 // pred_region
    _
  $region9: #{discriminator_forward.4} parent=0 // pred_fallthru
    _
  %v15 = vld [vmem:[%s0] sm:$0xf]
  %v16 = vld [vmem:[%s0 + $0x4] sm:$0xf]
  %v17 = vld [vmem:[%s0 + $0x8] sm:$0xf]
  %v18 = vld [vmem:[%s0 + $0xc] sm:$0xf]
  %v19 = vld [vmem:[%s0 + $0x10] sm:$0xf]
  %v20 = vld [vmem:[%s0 + $0x14] sm:$0xf]
  %v21 = vld [vmem:[%s0 + $0x18] sm:$0xf]
  %v22 = vld [vmem:[%s0 + $0x1c] sm:$0xf]
  %v23 = vld [vmem:[%s0 + $0x20] sm:$0xf]
  %v24 = vld [vmem:[%s0 + $0x24] sm:$0xf]
  %v25 = vld [vmem:[%s0 + $0x28] sm:$0xf]
  %v26 = vld [vmem:[%s0 + $0x2c] sm:$0xf]
  %v27 = vld [vmem:[%s0 + $0x30] sm:$0xf]
  %v28 = vld [vmem:[%s0 + $0x34] sm:$0xf]
  %v29 = vld [vmem:[%s0 + $0x38] sm:$0xf]
  %v30 = vld [vmem:[%s0 + $0x3c] sm:$0xf]
  %v31 = vld [vmem:[%s1] sm:$0xf]
  %v32 = vld [vmem:[%s1 + $0x4] sm:$0xf]
  %v33 = vld [vmem:[%s1 + $0x8] sm:$0xf]
  %v34 = vld [vmem:[%s1 + $0xc] sm:$0xf]
  %v35 = vld [vmem:[%s1 + $0x10] sm:$0xf]
  %v36 = vld [vmem:[%s1 + $0x14] sm:$0xf]
  %v37 = vld [vmem:[%s1 + $0x18] sm:$0xf]
  %v38 = vld [vmem:[%s1 + $0x1c] sm:$0xf]
  %v55 = vunpack.c.l.b16 %v15
  %v56 = vunpack.c.l.b16 %v16
  %v57 = vunpack.c.l.b16 %v17
  %v58 = vunpack.c.l.b16 %v18
  %v59 = vunpack.c.l.b16 %v19
  %v60 = vunpack.c.l.b16 %v20
  %v61 = vunpack.c.l.b16 %v21
  %v62 = vunpack.c.l.b16 %v22
  %v63 = vunpack.c.l.b16 %v23
  %v64 = vunpack.c.l.b16 %v24
  %v65 = vunpack.c.l.b16 %v25
  %v66 = vunpack.c.l.b16 %v26
  %v67 = vunpack.c.l.b16 %v27
  %v68 = vunpack.c.l.b16 %v28
  %v69 = vunpack.c.l.b16 %v29
  %v70 = vunpack.c.l.b16 %v30
  %v71 = vpack.c.b16 %v56, %v55
  %v72 = vpack.c.b16 %v58, %v57
  %v73 = vpack.c.b16 %v60, %v59
  %v74 = vpack.c.b16 %v62, %v61
  %v75 = vpack.c.b16 %v64, %v63
  %v76 = vpack.c.b16 %v66, %v65
  %v77 = vpack.c.b16 %v68, %v67
  %v78 = vpack.c.b16 %v70, %v69
  %v87 = vunpack.c.l.b16 %v31
  %v88 = vunpack.c.l.b16 %v32
  %v89 = vunpack.c.l.b16 %v33
  %v90 = vunpack.c.l.b16 %v34
  %v91 = vunpack.c.l.b16 %v35
  %v92 = vunpack.c.l.b16 %v36
  %v93 = vunpack.c.l.b16 %v37
  %v94 = vunpack.c.l.b16 %v38
  %v95 = vpack.c.b16 %v88, %v87
  %v96 = vpack.c.b16 %v90, %v89
  %v97 = vpack.c.b16 %v92, %v91
  %v98 = vpack.c.b16 %v94, %v93
  %vm103 = vcmask 523264
  %v105 = vsel %vm103, %v71, 0
  %v108 = vsel %vm103, %v72, 0
  %v111 = vsel %vm103, %v73, 0
  %v114 = vsel %vm103, %v74, 0
  %v117 = vsel %vm103, %v75, 0
  %v120 = vsel %vm103, %v76, 0
  %v123 = vsel %vm103, %v77, 0
  %v126 = vsel %vm103, %v78, 0
  %128 = vmatpush.bf16.msra.mxu0 0
  %129 = vmatpush.bf16.msra.mxu0 0
  %130 = vmatpush.bf16.msra.mxu0 0
  %131 = vmatpush.bf16.msra.mxu0 0
  %132 = vmatpush.bf16.msra.mxu0 %v98
  %133 = vmatpush.bf16.msra.mxu0 %v97
  %134 = vmatpush.bf16.msra.mxu0 %v96
  %135 = vmatpush.bf16.msra.mxu0 %v95
  %136 = vmatmul.bf16.gmra.mxu0 %v105
  %v137 = vpop.f32.mrf.mxu0
  %v138 = vadd.f32 0.0, %v137
  %v139 = vpop.f32.mrf.mxu0
  %v140 = vadd.f32 0.0, %v139
  %141 = vmatmul.bf16.gmra.mxu0 %v108
  %v142 = vpop.f32.mrf.mxu0
  %v143 = vadd.f32 0.0, %v142
  %v144 = vpop.f32.mrf.mxu0
  %v145 = vadd.f32 0.0, %v144
  %146 = vmatmul.bf16.gmra.mxu0 %v111
  %v147 = vpop.f32.mrf.mxu0
  %v148 = vadd.f32 0.0, %v147
  %v149 = vpop.f32.mrf.mxu0
  %v150 = vadd.f32 0.0, %v149
  %151 = vmatmul.bf16.gmra.mxu0 %v114
  %v152 = vpop.f32.mrf.mxu0
  %v153 = vadd.f32 0.0, %v152
  %v154 = vpop.f32.mrf.mxu0
  %v155 = vadd.f32 0.0, %v154
  %156 = vmatmul.bf16.gmra.mxu0 %v117
  %v157 = vpop.f32.mrf.mxu0
  %v158 = vadd.f32 0.0, %v157
  %v159 = vpop.f32.mrf.mxu0
  %v160 = vadd.f32 0.0, %v159
  %161 = vmatmul.bf16.gmra.mxu0 %v120
  %v162 = vpop.f32.mrf.mxu0
  %v163 = vadd.f32 0.0, %v162
  %v164 = vpop.f32.mrf.mxu0
  %v165 = vadd.f32 0.0, %v164
  %166 = vmatmul.bf16.gmra.mxu0 %v123
  %v167 = vpop.f32.mrf.mxu0
  %v168 = vadd.f32 0.0, %v167
  %v169 = vpop.f32.mrf.mxu0
  %v170 = vadd.f32 0.0, %v169
  %171 = vmatmul.bf16.gmra.mxu0 %v126
  %v172 = vpop.f32.mrf.mxu0
  %v173 = vadd.f32 0.0, %v172
  %v174 = vpop.f32.mrf.mxu0
  %v175 = vadd.f32 0.0, %v174
  %176 = vdwg.mxu0
  %v177 = vpack.c.bf16 %v138, %v138
  %v178 = vpack.c.bf16 %v140, %v140
  %v179 = vpack.c.bf16 %v143, %v143
  %v180 = vpack.c.bf16 %v145, %v145
  %v181 = vpack.c.bf16 %v148, %v148
  %v182 = vpack.c.bf16 %v150, %v150
  %v183 = vpack.c.bf16 %v153, %v153
  %v184 = vpack.c.bf16 %v155, %v155
  %v185 = vpack.c.bf16 %v158, %v158
  %v186 = vpack.c.bf16 %v160, %v160
  %v187 = vpack.c.bf16 %v163, %v163
  %v188 = vpack.c.bf16 %v165, %v165
  %v189 = vpack.c.bf16 %v168, %v168
  %v190 = vpack.c.bf16 %v170, %v170
  %v191 = vpack.c.bf16 %v173, %v173
  %v192 = vpack.c.bf16 %v175, %v175
  %193 = vst [vmem:[%s2] sm:$0xf] %v177
  %194 = vst [vmem:[%s2 + $0x4] sm:$0xf] %v178
  %195 = vst [vmem:[%s2 + $0x8] sm:$0xf] %v179
  %196 = vst [vmem:[%s2 + $0xc] sm:$0xf] %v180
  %197 = vst [vmem:[%s2 + $0x10] sm:$0xf] %v181
  %198 = vst [vmem:[%s2 + $0x14] sm:$0xf] %v182
  %199 = vst [vmem:[%s2 + $0x18] sm:$0xf] %v183
  %200 = vst [vmem:[%s2 + $0x1c] sm:$0xf] %v184
  %201 = vst [vmem:[%s2 + $0x20] sm:$0xf] %v185
  %202 = vst [vmem:[%s2 + $0x24] sm:$0xf] %v186
  %203 = vst [vmem:[%s2 + $0x28] sm:$0xf] %v187
  %204 = vst [vmem:[%s2 + $0x2c] sm:$0xf] %v188
  %205 = vst [vmem:[%s2 + $0x30] sm:$0xf] %v189
  %206 = vst [vmem:[%s2 + $0x34] sm:$0xf] %v190
  %207 = vst [vmem:[%s2 + $0x38] sm:$0xf] %v191
  %208 = vst [vmem:[%s2 + $0x3c] sm:$0xf] %v192
  %v209 = vadd.f32 %v138, %v140
  %v210 = vadd.f32 %v209, %v143
  %v211 = vadd.f32 %v210, %v145
  %v212 = vadd.f32 %v211, %v148
  %v213 = vadd.f32 %v212, %v150
  %v214 = vadd.f32 %v213, %v153
  %v215 = vadd.f32 %v214, %v155
  %v216 = vadd.f32 %v215, %v158
  %v217 = vadd.f32 %v216, %v160
  %v218 = vadd.f32 %v217, %v163
  %v219 = vadd.f32 %v218, %v165
  %v220 = vadd.f32 %v219, %v168
  %v221 = vadd.f32 %v220, %v170
  %v222 = vadd.f32 %v221, %v173
  %v223 = vadd.f32 %v222, %v175
  %v224 = vrot.slane %v223, 4
  %v225 = vadd.f32 %v223, %v224
  %v226 = vrot.slane %v225, 2
  %v227 = vadd.f32 %v225, %v226
  %v228 = vrot.slane %v227, 1
  %v229 = vadd.f32 %v227, %v228
  %230 = vst [vmem:[%s3] sm:$0x1] %v229
  %v231 = vmul.f32 %v138, %v138
  %v232 = vmul.f32 %v140, %v140
  %v233 = vmul.f32 %v143, %v143
  %v234 = vmul.f32 %v145, %v145
  %v235 = vmul.f32 %v148, %v148
  %v236 = vmul.f32 %v150, %v150
  %v237 = vmul.f32 %v153, %v153
  %v238 = vmul.f32 %v155, %v155
  %v239 = vmul.f32 %v158, %v158
  %v240 = vmul.f32 %v160, %v160
  %v241 = vmul.f32 %v163, %v163
  %v242 = vmul.f32 %v165, %v165
  %v243 = vmul.f32 %v168, %v168
  %v244 = vmul.f32 %v170, %v170
  %v245 = vmul.f32 %v173, %v173
  %v246 = vmul.f32 %v175, %v175
  %v247 = vadd.f32 %v231, %v232
  %v248 = vadd.f32 %v247, %v233
  %v249 = vadd.f32 %v248, %v234
  %v250 = vadd.f32 %v249, %v235
  %v251 = vadd.f32 %v250, %v236
  %v252 = vadd.f32 %v251, %v237
  %v253 = vadd.f32 %v252, %v238
  %v254 = vadd.f32 %v253, %v239
  %v255 = vadd.f32 %v254, %v240
  %v256 = vadd.f32 %v255, %v241
  %v257 = vadd.f32 %v256, %v242
  %v258 = vadd.f32 %v257, %v243
  %v259 = vadd.f32 %v258, %v244
  %v260 = vadd.f32 %v259, %v245
  %v261 = vadd.f32 %v260, %v246
  %v262 = vrot.slane %v261, 4
  %v263 = vadd.f32 %v261, %v262
  %v264 = vrot.slane %v263, 2
  %v265 = vadd.f32 %v263, %v264
  %v266 = vrot.slane %v265, 1
  %v267 = vadd.f32 %v265, %v266
  %268 = vst [vmem:[%s4] sm:$0x1] %v267
  // Predicated region
  $region10: #{discriminator_forward.4} parent=0 // pred_check
    _
  $region11: #{discriminator_forward.4} parent=0 // pred_check_branch
    %270 = sbr.rel (0) target = $region13
  $region12: #{discriminator_forward.4} parent=0 // pred_region
    _
  $region13: #{discriminator_forward.4} parent=0 // pred_fallthru
    _
  // Predicated region
  $region14: #{discriminator_forward.4} parent=0 // pred_check
    _
  $region15: #{discriminator_forward.4} parent=0 // pred_check_branch
    %272 = sbr.rel (0) target = $region17
  $region16: #{discriminator_forward.4} parent=0 // pred_region
    _
  $region17: #{discriminator_forward.4} parent=0 // pred_fallthru
    _
  // Predicated region
  $region18: #{discriminator_forward.4} parent=0 // pred_check
    _
  $region19: #{discriminator_forward.4} parent=0 // pred_check_branch
    %274 = sbr.rel (0) target = $region21
  $region20: #{discriminator_forward.4} parent=0 // pred_region
    _
  $region21: #{discriminator_forward.4} parent=0 // pred_fallthru
    _
  // Predicated region
  $region22: #{discriminator_forward.4} parent=0 // pred_check
    _
  $region23: #{discriminator_forward.4} parent=0 // pred_check_branch
    %276 = sbr.rel (0) target = $region25
  $region24: #{discriminator_forward.4} parent=0 // pred_region
    _
  $region25: #{discriminator_forward.4} parent=0 // pred_fallthru
    _
  // Predicated region
  $region26: #{discriminator_forward.4} parent=0 // pred_check
    _
  $region27: #{discriminator_forward.4} parent=0 // pred_check_branch
    %278 = sbr.rel (0) target = $region29
  $region28: #{discriminator_forward.4} parent=0 // pred_region
    _
  $region29: #{discriminator_forward.4} parent=0 // pred_fallthru
    _
  // Predicated region
  $region30: #{discriminator_forward.4} parent=0 // pred_check
    _
  $region31: #{discriminator_forward.4} parent=0 // pred_check_branch
    %280 = sbr.rel (0) target = $region33
  $region32: #{discriminator_forward.4} parent=0 // pred_region
    _
  $region33: #{discriminator_forward.4} parent=0 // pred_fallthru
    _

// kernel: discriminator_forward.7
$region0: #{discriminator_forward.7}
  #allocation0 [shape = 'u32[]', space=smem, size = 0x4, offset = 0x4, fixed_abs, tag = 'smem constant byte address 0x4 - core index']
  #allocation1 [shape = 'u32[72,128]{1,0:T(1,128)}', space=vmem, size = 0x9000, scoped, tag = 'internal scratch']
  %s0 = inlined_call_operand.vmem [shape: bf16[32,128], index: 0, kind: input, shape index: {}]
  %s1 = inlined_call_operand.vmem [shape: f32[1,128], index: 1, kind: input, shape index: {}]
  %s2 = inlined_call_operand.vmem [shape: f32[1,128], index: 2, kind: input, shape index: {}]
  %s3 = inlined_call_operand.vmem [shape: bf16[32,128], index: 3, kind: output, shape index: {}]
  %s4 = sld [smem:[#allocation0]]
  $region22: #{discriminator_forward.7} parent=0
    _
  %s6 = ssub.s32 1, %s4
  %s7 = scalar_select 0, %s6, %s4
  // Predicated region
  $region2: #{discriminator_forward.7} parent=0 // pred_check
    _
  $region3: #{discriminator_forward.7} parent=0 // pred_check_branch
    %9 = sbr.rel (0) target = $region5
  $region4: #{discriminator_forward.7} parent=0 // pred_region
    _
  $region5: #{discriminator_forward.7} parent=0 // pred_fallthru
    _
  // Predicated region
  $region6: #{discriminator_forward.7} parent=0 // pred_check
    _
  $region7: #{discriminator_forward.7} parent=0 // pred_check_branch
    %11 = sbr.rel (0) target = $region9
  $region8: #{discriminator_forward.7} parent=0 // pred_region
    _
  $region9: #{discriminator_forward.7} parent=0 // pred_fallthru
    _
  // Predicated region
  $region10: #{discriminator_forward.7} parent=0 // pred_check
    _
  $region11: #{discriminator_forward.7} parent=0 // pred_check_branch
    %13 = sbr.rel (0) target = $region13
  $region12: #{discriminator_forward.7} parent=0 // pred_region
    _
  $region13: #{discriminator_forward.7} parent=0 // pred_fallthru
    _
  %v14 = vld [vmem:[%s0] sm:$0xf]
  %v15 = vld [vmem:[%s0 + $0x4] sm:$0xf]
  %v16 = vld [vmem:[%s0 + $0x8] sm:$0xf]
  %v17 = vld [vmem:[%s0 + $0xc] sm:$0xf]
  %v18 = vunpack.c.l.bf16 %v14
  %v19 = vunpack.c.l.bf16 %v15
  %v20 = vunpack.c.l.bf16 %v16
  %v21 = vunpack.c.l.bf16 %v17
  %v22 = vld [vmem:[%s1] sm:$0x1]
  %v24 = vperm.slane %v22, 0
  %v26 = vmul.f32 %v18, %v24
  %v27 = vmul.f32 %v19, %v24
  %v28 = vmul.f32 %v20, %v24
  %v29 = vmul.f32 %v21, %v24
  %v30 = vld [vmem:[%s2] sm:$0x1]
  %v32 = vperm.slane %v30, 0
  %v34 = vadd.f32 %v26, %v32
  %v35 = vadd.f32 %v27, %v32
  %v36 = vadd.f32 %v28, %v32
  %v37 = vadd.f32 %v29, %v32
  %v38 = vmul.f32 %v34, 0.01
  %v39 = vmul.f32 %v35, 0.01
  %v40 = vmul.f32 %v36, 0.01
  %v41 = vmul.f32 %v37, 0.01
  %v42 = vmax.f32 %v34, %v38
  %v43 = vmax.f32 %v35, %v39
  %v44 = vmax.f32 %v36, %v40
  %v45 = vmax.f32 %v37, %v41
  %v46 = vpack.c.bf16 %v42, %v42
  %v47 = vpack.c.bf16 %v43, %v43
  %v48 = vpack.c.bf16 %v44, %v44
  %v49 = vpack.c.bf16 %v45, %v45
  %50 = vst [vmem:[%s3] sm:$0xf] %v46
  %51 = vst [vmem:[%s3 + $0x4] sm:$0xf] %v47
  %52 = vst [vmem:[%s3 + $0x8] sm:$0xf] %v48
  %53 = vst [vmem:[%s3 + $0xc] sm:$0xf] %v49
  // Predicated region
  $region14: #{discriminator_forward.7} parent=0 // pred_check
    _
  $region15: #{discriminator_forward.7} parent=0 // pred_check_branch
    %55 = sbr.rel (0) target = $region17
  $region16: #{discriminator_forward.7} parent=0 // pred_region
    _
  $region17: #{discriminator_forward.7} parent=0 // pred_fallthru
    _
  // Predicated region
  $region18: #{discriminator_forward.7} parent=0 // pred_check
    _
  $region19: #{discriminator_forward.7} parent=0 // pred_check_branch
    %57 = sbr.rel (0) target = $region21
  $region20: #{discriminator_forward.7} parent=0 // pred_region
    _
  $region21: #{discriminator_forward.7} parent=0 // pred_fallthru
    _

// kernel: discriminator_forward.6
$region0: #{discriminator_forward.6}
  #allocation0 [shape = 'u32[]', space=smem, size = 0x4, offset = 0x4, fixed_abs, tag = 'smem constant byte address 0x4 - core index']
  #allocation1 [shape = 'u32[72,128]{1,0:T(1,128)}', space=vmem, size = 0x9000, scoped, tag = 'internal scratch']
  %s0 = inlined_call_operand.vmem [shape: bf16[32,2048], index: 0, kind: input, shape index: {}]
  %s1 = inlined_call_operand.vmem [shape: bf16[2048,128], index: 1, kind: input, shape index: {}]
  %s2 = inlined_call_operand.vmem [shape: bf16[32,128], index: 2, kind: output, shape index: {0}]
  %s3 = inlined_call_operand.vmem [shape: f32[1,1,128], index: 3, kind: output, shape index: {1}]
  %s4 = inlined_call_operand.vmem [shape: f32[1,1,128], index: 4, kind: output, shape index: {2}]
  %5 = xla_tuple %s2, %s3, %s4
  %s6 = sld [smem:[#allocation0]]
  $region34: #{discriminator_forward.6} parent=0
    _
  %s8 = ssub.s32 1, %s6
  %s9 = scalar_select 0, %s8, %s6
  // Predicated region
  $region2: #{discriminator_forward.6} parent=0 // pred_check
    _
  $region3: #{discriminator_forward.6} parent=0 // pred_check_branch
    %11 = sbr.rel (0) target = $region5
  $region4: #{discriminator_forward.6} parent=0 // pred_region
    _
  $region5: #{discriminator_forward.6} parent=0 // pred_fallthru
    _
  // Predicated region
  $region6: #{discriminator_forward.6} parent=0 // pred_check
    _
  $region7: #{discriminator_forward.6} parent=0 // pred_check_branch
    %13 = sbr.rel (0) target = $region9
  $region8: #{discriminator_forward.6} parent=0 // pred_region
    _
  $region9: #{discriminator_forward.6} parent=0 // pred_fallthru
    _
  %v14 = vld [vmem:[%s0] sm:$0xff]
  %v15 = vld [vmem:[%s0 + $0x8] sm:$0xff]
  %v16 = vld [vmem:[%s0 + $0x10] sm:$0xff]
  %v17 = vld [vmem:[%s0 + $0x18] sm:$0xff]
  %v18 = vld [vmem:[%s0 + $0x20] sm:$0xff]
  %v19 = vld [vmem:[%s0 + $0x28] sm:$0xff]
  %v20 = vld [vmem:[%s0 + $0x30] sm:$0xff]
  %v21 = vld [vmem:[%s0 + $0x38] sm:$0xff]
  %v22 = vld [vmem:[%s0 + $0x40] sm:$0xff]
  %v23 = vld [vmem:[%s0 + $0x48] sm:$0xff]
  %v24 = vld [vmem:[%s0 + $0x50] sm:$0xff]
  %v25 = vld [vmem:[%s0 + $0x58] sm:$0xff]
  %v26 = vld [vmem:[%s0 + $0x60] sm:$0xff]
  %v27 = vld [vmem:[%s0 + $0x68] sm:$0xff]
  %v28 = vld [vmem:[%s0 + $0x70] sm:$0xff]
  %v29 = vld [vmem:[%s0 + $0x78] sm:$0xff]
  %v30 = vld [vmem:[%s0 + $0x80] sm:$0xff]
  %v31 = vld [vmem:[%s0 + $0x88] sm:$0xff]
  %v32 = vld [vmem:[%s0 + $0x90] sm:$0xff]
  %v33 = vld [vmem:[%s0 + $0x98] sm:$0xff]
  %v34 = vld [vmem:[%s0 + $0xa0] sm:$0xff]
  %v35 = vld [vmem:[%s0 + $0xa8] sm:$0xff]
  %v36 = vld [vmem:[%s0 + $0xb0] sm:$0xff]
  %v37 = vld [vmem:[%s0 + $0xb8] sm:$0xff]
  %v38 = vld [vmem:[%s0 + $0xc0] sm:$0xff]
  %v39 = vld [vmem:[%s0 + $0xc8] sm:$0xff]
  %v40 = vld [vmem:[%s0 + $0xd0] sm:$0xff]
  %v41 = vld [vmem:[%s0 + $0xd8] sm:$0xff]
  %v42 = vld [vmem:[%s0 + $0xe0] sm:$0xff]
  %v43 = vld [vmem:[%s0 + $0xe8] sm:$0xff]
  %v44 = vld [vmem:[%s0 + $0xf0] sm:$0xff]
  %v45 = vld [vmem:[%s0 + $0xf8] sm:$0xff]
  %v46 = vld [vmem:[%s1] sm:$0xf]
  %v47 = vld [vmem:[%s1 + $0x4] sm:$0xf]
  %v48 = vld [vmem:[%s1 + $0x8] sm:$0xf]
  %v49 = vld [vmem:[%s1 + $0xc] sm:$0xf]
  %v50 = vld [vmem:[%s1 + $0x10] sm:$0xf]
  %v51 = vld [vmem:[%s1 + $0x14] sm:$0xf]
  %v52 = vld [vmem:[%s1 + $0x18] sm:$0xf]
  %v53 = vld [vmem:[%s1 + $0x1c] sm:$0xf]
  %v54 = vld [vmem:[%s1 + $0x20] sm:$0xf]
  %v55 = vld [vmem:[%s1 + $0x24] sm:$0xf]
  %v56 = vld [vmem:[%s1 + $0x28] sm:$0xf]
  %v57 = vld [vmem:[%s1 + $0x2c] sm:$0xf]
  %v58 = vld [vmem:[%s1 + $0x30] sm:$0xf]
  %v59 = vld [vmem:[%s1 + $0x34] sm:$0xf]
  %v60 = vld [vmem:[%s1 + $0x38] sm:$0xf]
  %v61 = vld [vmem:[%s1 + $0x3c] sm:$0xf]
  %v62 = vld [vmem:[%s1 + $0x40] sm:$0xf]
  %v63 = vld [vmem:[%s1 + $0x44] sm:$0xf]
  %v64 = vld [vmem:[%s1 + $0x48] sm:$0xf]
  %v65 = vld [vmem:[%s1 + $0x4c] sm:$0xf]
  %v66 = vld [vmem:[%s1 + $0x50] sm:$0xf]
  %v67 = vld [vmem:[%s1 + $0x54] sm:$0xf]
  %v68 = vld [vmem:[%s1 + $0x58] sm:$0xf]
  %v69 = vld [vmem:[%s1 + $0x5c] sm:$0xf]
  %v70 = vld [vmem:[%s1 + $0x60] sm:$0xf]
  %v71 = vld [vmem:[%s1 + $0x64] sm:$0xf]
  %v72 = vld [vmem:[%s1 + $0x68] sm:$0xf]
  %v73 = vld [vmem:[%s1 + $0x6c] sm:$0xf]
  %v74 = vld [vmem:[%s1 + $0x70] sm:$0xf]
  %v75 = vld [vmem:[%s1 + $0x74] sm:$0xf]
  %v76 = vld [vmem:[%s1 + $0x78] sm:$0xf]
  %v77 = vld [vmem:[%s1 + $0x7c] sm:$0xf]
  %v78 = vld [vmem:[%s1 + $0x80] sm:$0xf]
  %v79 = vld [vmem:[%s1 + $0x84] sm:$0xf]
  %v80 = vld [vmem:[%s1 + $0x88] sm:$0xf]
  %v81 = vld [vmem:[%s1 + $0x8c] sm:$0xf]
  %v82 = vld [vmem:[%s1 + $0x90] sm:$0xf]
  %v83 = vld [vmem:[%s1 + $0x94] sm:$0xf]
  %v84 = vld [vmem:[%s1 + $0x98] sm:$0xf]
  %v85 = vld [vmem:[%s1 + $0x9c] sm:$0xf]
  %v86 = vld [vmem:[%s1 + $0xa0] sm:$0xf]
  %v87 = vld [vmem:[%s1 + $0xa4] sm:$0xf]
  %v88 = vld [vmem:[%s1 + $0xa8] sm:$0xf]
  %v89 = vld [vmem:[%s1 + $0xac] sm:$0xf]
  %v90 = vld [vmem:[%s1 + $0xb0] sm:$0xf]
  %v91 = vld [vmem:[%s1 + $0xb4] sm:$0xf]
  %v92 = vld [vmem:[%s1 + $0xb8] sm:$0xf]
  %v93 = vld [vmem:[%s1 + $0xbc] sm:$0xf]
  %v94 = vld [vmem:[%s1 + $0xc0] sm:$0xf]
  %v95 = vld [vmem:[%s1 + $0xc4] sm:$0xf]
  %v96 = vld [vmem:[%s1 + $0xc8] sm:$0xf]
  %v97 = vld [vmem:[%s1 + $0xcc] sm:$0xf]
  %v98 = vld [vmem:[%s1 + $0xd0] sm:$0xf]
  %v99 = vld [vmem:[%s1 + $0xd4] sm:$0xf]
  %v100 = vld [vmem:[%s1 + $0xd8] sm:$0xf]
  %v101 = vld [vmem:[%s1 + $0xdc] sm:$0xf]
  %v102 = vld [vmem:[%s1 + $0xe0] sm:$0xf]
  %v103 = vld [vmem:[%s1 + $0xe4] sm:$0xf]
  %v104 = vld [vmem:[%s1 + $0xe8] sm:$0xf]
  %v105 = vld [vmem:[%s1 + $0xec] sm:$0xf]
  %v106 = vld [vmem:[%s1 + $0xf0] sm:$0xf]
  %v107 = vld [vmem:[%s1 + $0xf4] sm:$0xf]
  %v108 = vld [vmem:[%s1 + $0xf8] sm:$0xf]
  %v109 = vld [vmem:[%s1 + $0xfc] sm:$0xf]
  %v110 = vld [vmem:[%s1 + $0x100] sm:$0xf]
  %v111 = vld [vmem:[%s1 + $0x104] sm:$0xf]
  %v112 = vld [vmem:[%s1 + $0x108] sm:$0xf]
  %v113 = vld [vmem:[%s1 + $0x10c] sm:$0xf]
  %v114 = vld [vmem:[%s1 + $0x110] sm:$0xf]
  %v115 = vld [vmem:[%s1 + $0x114] sm:$0xf]
  %v116 = vld [vmem:[%s1 + $0x118] sm:$0xf]
  %v117 = vld [vmem:[%s1 + $0x11c] sm:$0xf]
  %v118 = vld [vmem:[%s1 + $0x120] sm:$0xf]
  %v119 = vld [vmem:[%s1 + $0x124] sm:$0xf]
  %v120 = vld [vmem:[%s1 + $0x128] sm:$0xf]
  %v121 = vld [vmem:[%s1 + $0x12c] sm:$0xf]
  %v122 = vld [vmem:[%s1 + $0x130] sm:$0xf]
  %v123 = vld [vmem:[%s1 + $0x134] sm:$0xf]
  %v124 = vld [vmem:[%s1 + $0x138] sm:$0xf]
  %v125 = vld [vmem:[%s1 + $0x13c] sm:$0xf]
  %v126 = vld [vmem:[%s1 + $0x140] sm:$0xf]
  %v127 = vld [vmem:[%s1 + $0x144] sm:$0xf]
  %v128 = vld [vmem:[%s1 + $0x148] sm:$0xf]
  %v129 = vld [vmem:[%s1 + $0x14c] sm:$0xf]
  %v130 = vld [vmem:[%s1 + $0x150] sm:$0xf]
  %v131 = vld [vmem:[%s1 + $0x154] sm:$0xf]
  %v132 = vld [vmem:[%s1 + $0x158] sm:$0xf]
  %v133 = vld [vmem:[%s1 + $0x15c] sm:$0xf]
  %v134 = vld [vmem:[%s1 + $0x160] sm:$0xf]
  %v135 = vld [vmem:[%s1 + $0x164] sm:$0xf]
  %v136 = vld [vmem:[%s1 + $0x168] sm:$0xf]
  %v137 = vld [vmem:[%s1 + $0x16c] sm:$0xf]
  %v138 = vld [vmem:[%s1 + $0x170] sm:$0xf]
  %v139 = vld [vmem:[%s1 + $0x174] sm:$0xf]
  %v140 = vld [vmem:[%s1 + $0x178] sm:$0xf]
  %v141 = vld [vmem:[%s1 + $0x17c] sm:$0xf]
  %v142 = vld [vmem:[%s1 + $0x180] sm:$0xf]
  %v143 = vld [vmem:[%s1 + $0x184] sm:$0xf]
  %v144 = vld [vmem:[%s1 + $0x188] sm:$0xf]
  %v145 = vld [vmem:[%s1 + $0x18c] sm:$0xf]
  %v146 = vld [vmem:[%s1 + $0x190] sm:$0xf]
  %v147 = vld [vmem:[%s1 + $0x194] sm:$0xf]
  %v148 = vld [vmem:[%s1 + $0x198] sm:$0xf]
  %v149 = vld [vmem:[%s1 + $0x19c] sm:$0xf]
  %v150 = vld [vmem:[%s1 + $0x1a0] sm:$0xf]
  %v151 = vld [vmem:[%s1 + $0x1a4] sm:$0xf]
  %v152 = vld [vmem:[%s1 + $0x1a8] sm:$0xf]
  %v153 = vld [vmem:[%s1 + $0x1ac] sm:$0xf]
  %v154 = vld [vmem:[%s1 + $0x1b0] sm:$0xf]
  %v155 = vld [vmem:[%s1 + $0x1b4] sm:$0xf]
  %v156 = vld [vmem:[%s1 + $0x1b8] sm:$0xf]
  %v157 = vld [vmem:[%s1 + $0x1bc] sm:$0xf]
  %v158 = vld [vmem:[%s1 + $0x1c0] sm:$0xf]
  %v159 = vld [vmem:[%s1 + $0x1c4] sm:$0xf]
  %v160 = vld [vmem:[%s1 + $0x1c8] sm:$0xf]
  %v161 = vld [vmem:[%s1 + $0x1cc] sm:$0xf]
  %v162 = vld [vmem:[%s1 + $0x1d0] sm:$0xf]
  %v163 = vld [vmem:[%s1 + $0x1d4] sm:$0xf]
  %v164 = vld [vmem:[%s1 + $0x1d8] sm:$0xf]
  %v165 = vld [vmem:[%s1 + $0x1dc] sm:$0xf]
  %v166 = vld [vmem:[%s1 + $0x1e0] sm:$0xf]
  %v167 = vld [vmem:[%s1 + $0x1e4] sm:$0xf]
  %v168 = vld [vmem:[%s1 + $0x1e8] sm:$0xf]
  %v169 = vld [vmem:[%s1 + $0x1ec] sm:$0xf]
  %v170 = vld [vmem:[%s1 + $0x1f0] sm:$0xf]
  %v171 = vld [vmem:[%s1 + $0x1f4] sm:$0xf]
  %v172 = vld [vmem:[%s1 + $0x1f8] sm:$0xf]
  %v173 = vld [vmem:[%s1 + $0x1fc] sm:$0xf]
  %v174 = vld [vmem:[%s1 + $0x200] sm:$0xf]
  %v175 = vld [vmem:[%s1 + $0x204] sm:$0xf]
  %v176 = vld [vmem:[%s1 + $0x208] sm:$0xf]
  %v177 = vld [vmem:[%s1 + $0x20c] sm:$0xf]
  %v178 = vld [vmem:[%s1 + $0x210] sm:$0xf]
  %v179 = vld [vmem:[%s1 + $0x214] sm:$0xf]
  %v180 = vld [vmem:[%s1 + $0x218] sm:$0xf]
  %v181 = vld [vmem:[%s1 + $0x21c] sm:$0xf]
  %v182 = vld [vmem:[%s1 + $0x220] sm:$0xf]
  %v183 = vld [vmem:[%s1 + $0x224] sm:$0xf]
  %v184 = vld [vmem:[%s1 + $0x228] sm:$0xf]
  %v185 = vld [vmem:[%s1 + $0x22c] sm:$0xf]
  %v186 = vld [vmem:[%s1 + $0x230] sm:$0xf]
  %v187 = vld [vmem:[%s1 + $0x234] sm:$0xf]
  %v188 = vld [vmem:[%s1 + $0x238] sm:$0xf]
  %v189 = vld [vmem:[%s1 + $0x23c] sm:$0xf]
  %v190 = vld [vmem:[%s1 + $0x240] sm:$0xf]
  %v191 = vld [vmem:[%s1 + $0x244] sm:$0xf]
  %v192 = vld [vmem:[%s1 + $0x248] sm:$0xf]
  %v193 = vld [vmem:[%s1 + $0x24c] sm:$0xf]
  %v194 = vld [vmem:[%s1 + $0x250] sm:$0xf]
  %v195 = vld [vmem:[%s1 + $0x254] sm:$0xf]
  %v196 = vld [vmem:[%s1 + $0x258] sm:$0xf]
  %v197 = vld [vmem:[%s1 + $0x25c] sm:$0xf]
  %v198 = vld [vmem:[%s1 + $0x260] sm:$0xf]
  %v199 = vld [vmem:[%s1 + $0x264] sm:$0xf]
  %v200 = vld [vmem:[%s1 + $0x268] sm:$0xf]
  %v201 = vld [vmem:[%s1 + $0x26c] sm:$0xf]
  %v202 = vld [vmem:[%s1 + $0x270] sm:$0xf]
  %v203 = vld [vmem:[%s1 + $0x274] sm:$0xf]
  %v204 = vld [vmem:[%s1 + $0x278] sm:$0xf]
  %v205 = vld [vmem:[%s1 + $0x27c] sm:$0xf]
  %v206 = vld [vmem:[%s1 + $0x280] sm:$0xf]
  %v207 = vld [vmem:[%s1 + $0x284] sm:$0xf]
  %v208 = vld [vmem:[%s1 + $0x288] sm:$0xf]
  %v209 = vld [vmem:[%s1 + $0x28c] sm:$0xf]
  %v210 = vld [vmem:[%s1 + $0x290] sm:$0xf]
  %v211 = vld [vmem:[%s1 + $0x294] sm:$0xf]
  %v212 = vld [vmem:[%s1 + $0x298] sm:$0xf]
  %v213 = vld [vmem:[%s1 + $0x29c] sm:$0xf]
  %v214 = vld [vmem:[%s1 + $0x2a0] sm:$0xf]
  %v215 = vld [vmem:[%s1 + $0x2a4] sm:$0xf]
  %v216 = vld [vmem:[%s1 + $0x2a8] sm:$0xf]
  %v217 = vld [vmem:[%s1 + $0x2ac] sm:$0xf]
  %v218 = vld [vmem:[%s1 + $0x2b0] sm:$0xf]
  %v219 = vld [vmem:[%s1 + $0x2b4] sm:$0xf]
  %v220 = vld [vmem:[%s1 + $0x2b8] sm:$0xf]
  %v221 = vld [vmem:[%s1 + $0x2bc] sm:$0xf]
  %v222 = vld [vmem:[%s1 + $0x2c0] sm:$0xf]
  %v223 = vld [vmem:[%s1 + $0x2c4] sm:$0xf]
  %v224 = vld [vmem:[%s1 + $0x2c8] sm:$0xf]
  %v225 = vld [vmem:[%s1 + $0x2cc] sm:$0xf]
  %v226 = vld [vmem:[%s1 + $0x2d0] sm:$0xf]
  %v227 = vld [vmem:[%s1 + $0x2d4] sm:$0xf]
  %v228 = vld [vmem:[%s1 + $0x2d8] sm:$0xf]
  %v229 = vld [vmem:[%s1 + $0x2dc] sm:$0xf]
  %v230 = vld [vmem:[%s1 + $0x2e0] sm:$0xf]
  %v231 = vld [vmem:[%s1 + $0x2e4] sm:$0xf]
  %v232 = vld [vmem:[%s1 + $0x2e8] sm:$0xf]
  %v233 = vld [vmem:[%s1 + $0x2ec] sm:$0xf]
  %v234 = vld [vmem:[%s1 + $0x2f0] sm:$0xf]
  %v235 = vld [vmem:[%s1 + $0x2f4] sm:$0xf]
  %v236 = vld [vmem:[%s1 + $0x2f8] sm:$0xf]
  %v237 = vld [vmem:[%s1 + $0x2fc] sm:$0xf]
  %v238 = vld [vmem:[%s1 + $0x300] sm:$0xf]
  %v239 = vld [vmem:[%s1 + $0x304] sm:$0xf]
  %v240 = vld [vmem:[%s1 + $0x308] sm:$0xf]
  %v241 = vld [vmem:[%s1 + $0x30c] sm:$0xf]
  %v242 = vld [vmem:[%s1 + $0x310] sm:$0xf]
  %v243 = vld [vmem:[%s1 + $0x314] sm:$0xf]
  %v244 = vld [vmem:[%s1 + $0x318] sm:$0xf]
  %v245 = vld [vmem:[%s1 + $0x31c] sm:$0xf]
  %v246 = vld [vmem:[%s1 + $0x320] sm:$0xf]
  %v247 = vld [vmem:[%s1 + $0x324] sm:$0xf]
  %v248 = vld [vmem:[%s1 + $0x328] sm:$0xf]
  %v249 = vld [vmem:[%s1 + $0x32c] sm:$0xf]
  %v250 = vld [vmem:[%s1 + $0x330] sm:$0xf]
  %v251 = vld [vmem:[%s1 + $0x334] sm:$0xf]
  %v252 = vld [vmem:[%s1 + $0x338] sm:$0xf]
  %v253 = vld [vmem:[%s1 + $0x33c] sm:$0xf]
  %v254 = vld [vmem:[%s1 + $0x340] sm:$0xf]
  %v255 = vld [vmem:[%s1 + $0x344] sm:$0xf]
  %v256 = vld [vmem:[%s1 + $0x348] sm:$0xf]
  %v257 = vld [vmem:[%s1 + $0x34c] sm:$0xf]
  %v258 = vld [vmem:[%s1 + $0x350] sm:$0xf]
  %v259 = vld [vmem:[%s1 + $0x354] sm:$0xf]
  %v260 = vld [vmem:[%s1 + $0x358] sm:$0xf]
  %v261 = vld [vmem:[%s1 + $0x35c] sm:$0xf]
  %v262 = vld [vmem:[%s1 + $0x360] sm:$0xf]
  %v263 = vld [vmem:[%s1 + $0x364] sm:$0xf]
  %v264 = vld [vmem:[%s1 + $0x368] sm:$0xf]
  %v265 = vld [vmem:[%s1 + $0x36c] sm:$0xf]
  %v266 = vld [vmem:[%s1 + $0x370] sm:$0xf]
  %v267 = vld [vmem:[%s1 + $0x374] sm:$0xf]
  %v268 = vld [vmem:[%s1 + $0x378] sm:$0xf]
  %v269 = vld [vmem:[%s1 + $0x37c] sm:$0xf]
  %v270 = vld [vmem:[%s1 + $0x380] sm:$0xf]
  %v271 = vld [vmem:[%s1 + $0x384] sm:$0xf]
  %v272 = vld [vmem:[%s1 + $0x388] sm:$0xf]
  %v273 = vld [vmem:[%s1 + $0x38c] sm:$0xf]
  %v274 = vld [vmem:[%s1 + $0x390] sm:$0xf]
  %v275 = vld [vmem:[%s1 + $0x394] sm:$0xf]
  %v276 = vld [vmem:[%s1 + $0x398] sm:$0xf]
  %v277 = vld [vmem:[%s1 + $0x39c] sm:$0xf]
  %v278 = vld [vmem:[%s1 + $0x3a0] sm:$0xf]
  %v279 = vld [vmem:[%s1 + $0x3a4] sm:$0xf]
  %v280 = vld [vmem:[%s1 + $0x3a8] sm:$0xf]
  %v281 = vld [vmem:[%s1 + $0x3ac] sm:$0xf]
  %v282 = vld [vmem:[%s1 + $0x3b0] sm:$0xf]
  %v283 = vld [vmem:[%s1 + $0x3b4] sm:$0xf]
  %v284 = vld [vmem:[%s1 + $0x3b8] sm:$0xf]
  %v285 = vld [vmem:[%s1 + $0x3bc] sm:$0xf]
  %v286 = vld [vmem:[%s1 + $0x3c0] sm:$0xf]
  %v287 = vld [vmem:[%s1 + $0x3c4] sm:$0xf]
  %v288 = vld [vmem:[%s1 + $0x3c8] sm:$0xf]
  %v289 = vld [vmem:[%s1 + $0x3cc] sm:$0xf]
  %v290 = vld [vmem:[%s1 + $0x3d0] sm:$0xf]
  %v291 = vld [vmem:[%s1 + $0x3d4] sm:$0xf]
  %v292 = vld [vmem:[%s1 + $0x3d8] sm:$0xf]
  %v293 = vld [vmem:[%s1 + $0x3dc] sm:$0xf]
  %v294 = vld [vmem:[%s1 + $0x3e0] sm:$0xf]
  %v295 = vld [vmem:[%s1 + $0x3e4] sm:$0xf]
  %v296 = vld [vmem:[%s1 + $0x3e8] sm:$0xf]
  %v297 = vld [vmem:[%s1 + $0x3ec] sm:$0xf]
  %v298 = vld [vmem:[%s1 + $0x3f0] sm:$0xf]
  %v299 = vld [vmem:[%s1 + $0x3f4] sm:$0xf]
  %v300 = vld [vmem:[%s1 + $0x3f8] sm:$0xf]
  %v301 = vld [vmem:[%s1 + $0x3fc] sm:$0xf]
  %v334 = vunpack.c.l.b16 %v14
  %v335 = vunpack.c.h.b16 %v14
  %v336 = vunpack.c.l.b16 %v15
  %v337 = vunpack.c.h.b16 %v15
  %v338 = vunpack.c.l.b16 %v16
  %v339 = vunpack.c.h.b16 %v16
  %v340 = vunpack.c.l.b16 %v17
  %v341 = vunpack.c.h.b16 %v17
  %v342 = vunpack.c.l.b16 %v18
  %v343 = vunpack.c.h.b16 %v18
  %v344 = vunpack.c.l.b16 %v19
  %v345 = vunpack.c.h.b16 %v19
  %v346 = vunpack.c.l.b16 %v20
  %v347 = vunpack.c.h.b16 %v20
  %v348 = vunpack.c.l.b16 %v21
  %v349 = vunpack.c.h.b16 %v21
  %v350 = vunpack.c.l.b16 %v22
  %v351 = vunpack.c.h.b16 %v22
  %v352 = vunpack.c.l.b16 %v23
  %v353 = vunpack.c.h.b16 %v23
  %v354 = vunpack.c.l.b16 %v24
  %v355 = vunpack.c.h.b16 %v24
  %v356 = vunpack.c.l.b16 %v25
  %v357 = vunpack.c.h.b16 %v25
  %v358 = vunpack.c.l.b16 %v26
  %v359 = vunpack.c.h.b16 %v26
  %v360 = vunpack.c.l.b16 %v27
  %v361 = vunpack.c.h.b16 %v27
  %v362 = vunpack.c.l.b16 %v28
  %v363 = vunpack.c.h.b16 %v28
  %v364 = vunpack.c.l.b16 %v29
  %v365 = vunpack.c.h.b16 %v29
  %v366 = vunpack.c.l.b16 %v30
  %v367 = vunpack.c.h.b16 %v30
  %v368 = vunpack.c.l.b16 %v31
  %v369 = vunpack.c.h.b16 %v31
  %v370 = vunpack.c.l.b16 %v32
  %v371 = vunpack.c.h.b16 %v32
  %v372 = vunpack.c.l.b16 %v33
  %v373 = vunpack.c.h.b16 %v33
  %v374 = vunpack.c.l.b16 %v34
  %v375 = vunpack.c.h.b16 %v34
  %v376 = vunpack.c.l.b16 %v35
  %v377 = vunpack.c.h.b16 %v35
  %v378 = vunpack.c.l.b16 %v36
  %v379 = vunpack.c.h.b16 %v36
  %v380 = vunpack.c.l.b16 %v37
  %v381 = vunpack.c.h.b16 %v37
  %v382 = vunpack.c.l.b16 %v38
  %v383 = vunpack.c.h.b16 %v38
  %v384 = vunpack.c.l.b16 %v39
  %v385 = vunpack.c.h.b16 %v39
  %v386 = vunpack.c.l.b16 %v40
  %v387 = vunpack.c.h.b16 %v40
  %v388 = vunpack.c.l.b16 %v41
  %v389 = vunpack.c.h.b16 %v41
  %v390 = vunpack.c.l.b16 %v42
  %v391 = vunpack.c.h.b16 %v42
  %v392 = vunpack.c.l.b16 %v43
  %v393 = vunpack.c.h.b16 %v43
  %v394 = vunpack.c.l.b16 %v44
  %v395 = vunpack.c.h.b16 %v44
  %v396 = vunpack.c.l.b16 %v45
  %v397 = vunpack.c.h.b16 %v45
  %v398 = vpack.c.b16 %v350, %v334
  %v399 = vpack.c.b16 %v351, %v335
  %v400 = vpack.c.b16 %v352, %v336
  %v401 = vpack.c.b16 %v353, %v337
  %v402 = vpack.c.b16 %v354, %v338
  %v403 = vpack.c.b16 %v355, %v339
  %v404 = vpack.c.b16 %v356, %v340
  %v405 = vpack.c.b16 %v357, %v341
  %v406 = vpack.c.b16 %v358, %v342
  %v407 = vpack.c.b16 %v359, %v343
  %v408 = vpack.c.b16 %v360, %v344
  %v409 = vpack.c.b16 %v361, %v345
  %v410 = vpack.c.b16 %v362, %v346
  %v411 = vpack.c.b16 %v363, %v347
  %v412 = vpack.c.b16 %v364, %v348
  %v413 = vpack.c.b16 %v365, %v349
  %v414 = vpack.c.b16 %v382, %v366
  %v415 = vpack.c.b16 %v383, %v367
  %v416 = vpack.c.b16 %v384, %v368
  %v417 = vpack.c.b16 %v385, %v369
  %v418 = vpack.c.b16 %v386, %v370
  %v419 = vpack.c.b16 %v387, %v371
  %v420 = vpack.c.b16 %v388, %v372
  %v421 = vpack.c.b16 %v389, %v373
  %v422 = vpack.c.b16 %v390, %v374
  %v423 = vpack.c.b16 %v391, %v375
  %v424 = vpack.c.b16 %v392, %v376
  %v425 = vpack.c.b16 %v393, %v377
  %v426 = vpack.c.b16 %v394, %v378
  %v427 = vpack.c.b16 %v395, %v379
  %v428 = vpack.c.b16 %v396, %v380
  %v429 = vpack.c.b16 %v397, %v381
  %v718 = vunpack.c.l.b16 %v46
  %v719 = vunpack.c.l.b16 %v47
  %v720 = vunpack.c.l.b16 %v48
  %v721 = vunpack.c.l.b16 %v49
  %v722 = vunpack.c.l.b16 %v50
  %v723 = vunpack.c.l.b16 %v51
  %v724 = vunpack.c.l.b16 %v52
  %v725 = vunpack.c.l.b16 %v53
  %v726 = vunpack.c.l.b16 %v54
  %v727 = vunpack.c.l.b16 %v55
  %v728 = vunpack.c.l.b16 %v56
  %v729 = vunpack.c.l.b16 %v57
  %v730 = vunpack.c.l.b16 %v58
  %v731 = vunpack.c.l.b16 %v59
  %v732 = vunpack.c.l.b16 %v60
  %v733 = vunpack.c.l.b16 %v61
  %v734 = vunpack.c.l.b16 %v62
  %v735 = vunpack.c.l.b16 %v63
  %v736 = vunpack.c.l.b16 %v64
  %v737 = vunpack.c.l.b16 %v65
  %v738 = vunpack.c.l.b16 %v66
  %v739 = vunpack.c.l.b16 %v67
  %v740 = vunpack.c.l.b16 %v68
  %v741 = vunpack.c.l.b16 %v69
  %v742 = vunpack.c.l.b16 %v70
  %v743 = vunpack.c.l.b16 %v71
  %v744 = vunpack.c.l.b16 %v72
  %v745 = vunpack.c.l.b16 %v73
  %v746 = vunpack.c.l.b16 %v74
  %v747 = vunpack.c.l.b16 %v75
  %v748 = vunpack.c.l.b16 %v76
  %v749 = vunpack.c.l.b16 %v77
  %v750 = vunpack.c.l.b16 %v78
  %v751 = vunpack.c.l.b16 %v79
  %v752 = vunpack.c.l.b16 %v80
  %v753 = vunpack.c.l.b16 %v81
  %v754 = vunpack.c.l.b16 %v82
  %v755 = vunpack.c.l.b16 %v83
  %v756 = vunpack.c.l.b16 %v84
  %v757 = vunpack.c.l.b16 %v85
  %v758 = vunpack.c.l.b16 %v86
  %v759 = vunpack.c.l.b16 %v87
  %v760 = vunpack.c.l.b16 %v88
  %v761 = vunpack.c.l.b16 %v89
  %v762 = vunpack.c.l.b16 %v90
  %v763 = vunpack.c.l.b16 %v91
  %v764 = vunpack.c.l.b16 %v92
  %v765 = vunpack.c.l.b16 %v93
  %v766 = vunpack.c.l.b16 %v94
  %v767 = vunpack.c.l.b16 %v95
  %v768 = vunpack.c.l.b16 %v96
  %v769 = vunpack.c.l.b16 %v97
  %v770 = vunpack.c.l.b16 %v98
  %v771 = vunpack.c.l.b16 %v99
  %v772 = vunpack.c.l.b16 %v100
  %v773 = vunpack.c.l.b16 %v101
  %v774 = vunpack.c.l.b16 %v102
  %v775 = vunpack.c.l.b16 %v103
  %v776 = vunpack.c.l.b16 %v104
  %v777 = vunpack.c.l.b16 %v105
  %v778 = vunpack.c.l.b16 %v106
  %v779 = vunpack.c.l.b16 %v107
  %v780 = vunpack.c.l.b16 %v108
  %v781 = vunpack.c.l.b16 %v109
  %v782 = vunpack.c.l.b16 %v110
  %v783 = vunpack.c.l.b16 %v111
  %v784 = vunpack.c.l.b16 %v112
  %v785 = vunpack.c.l.b16 %v113
  %v786 = vunpack.c.l.b16 %v114
  %v787 = vunpack.c.l.b16 %v115
  %v788 = vunpack.c.l.b16 %v116
  %v789 = vunpack.c.l.b16 %v117
  %v790 = vunpack.c.l.b16 %v118
  %v791 = vunpack.c.l.b16 %v119
  %v792 = vunpack.c.l.b16 %v120
  %v793 = vunpack.c.l.b16 %v121
  %v794 = vunpack.c.l.b16 %v122
  %v795 = vunpack.c.l.b16 %v123
  %v796 = vunpack.c.l.b16 %v124
  %v797 = vunpack.c.l.b16 %v125
  %v798 = vunpack.c.l.b16 %v126
  %v799 = vunpack.c.l.b16 %v127
  %v800 = vunpack.c.l.b16 %v128
  %v801 = vunpack.c.l.b16 %v129
  %v802 = vunpack.c.l.b16 %v130
  %v803 = vunpack.c.l.b16 %v131
  %v804 = vunpack.c.l.b16 %v132
  %v805 = vunpack.c.l.b16 %v133
  %v806 = vunpack.c.l.b16 %v134
  %v807 = vunpack.c.l.b16 %v135
  %v808 = vunpack.c.l.b16 %v136
  %v809 = vunpack.c.l.b16 %v137
  %v810 = vunpack.c.l.b16 %v138
  %v811 = vunpack.c.l.b16 %v139
  %v812 = vunpack.c.l.b16 %v140
  %v813 = vunpack.c.l.b16 %v141
  %v814 = vunpack.c.l.b16 %v142
  %v815 = vunpack.c.l.b16 %v143
  %v816 = vunpack.c.l.b16 %v144
  %v817 = vunpack.c.l.b16 %v145
  %v818 = vunpack.c.l.b16 %v146
  %v819 = vunpack.c.l.b16 %v147
  %v820 = vunpack.c.l.b16 %v148
  %v821 = vunpack.c.l.b16 %v149
  %v822 = vunpack.c.l.b16 %v150
  %v823 = vunpack.c.l.b16 %v151
  %v824 = vunpack.c.l.b16 %v152
  %v825 = vunpack.c.l.b16 %v153
  %v826 = vunpack.c.l.b16 %v154
  %v827 = vunpack.c.l.b16 %v155
  %v828 = vunpack.c.l.b16 %v156
  %v829 = vunpack.c.l.b16 %v157
  %v830 = vunpack.c.l.b16 %v158
  %v831 = vunpack.c.l.b16 %v159
  %v832 = vunpack.c.l.b16 %v160
  %v833 = vunpack.c.l.b16 %v161
  %v834 = vunpack.c.l.b16 %v162
  %v835 = vunpack.c.l.b16 %v163
  %v836 = vunpack.c.l.b16 %v164
  %v837 = vunpack.c.l.b16 %v165
  %v838 = vunpack.c.l.b16 %v166
  %v839 = vunpack.c.l.b16 %v167
  %v840 = vunpack.c.l.b16 %v168
  %v841 = vunpack.c.l.b16 %v169
  %v842 = vunpack.c.l.b16 %v170
  %v843 = vunpack.c.l.b16 %v171
  %v844 = vunpack.c.l.b16 %v172
  %v845 = vunpack.c.l.b16 %v173
  %v846 = vunpack.c.l.b16 %v174
  %v847 = vunpack.c.l.b16 %v175
  %v848 = vunpack.c.l.b16 %v176
  %v849 = vunpack.c.l.b16 %v177
  %v850 = vunpack.c.l.b16 %v178
  %v851 = vunpack.c.l.b16 %v179
  %v852 = vunpack.c.l.b16 %v180
  %v853 = vunpack.c.l.b16 %v181
  %v854 = vunpack.c.l.b16 %v182
  %v855 = vunpack.c.l.b16 %v183
  %v856 = vunpack.c.l.b16 %v184
  %v857 = vunpack.c.l.b16 %v185
  %v858 = vunpack.c.l.b16 %v186
  %v859 = vunpack.c.l.b16 %v187
  %v860 = vunpack.c.l.b16 %v188
  %v861 = vunpack.c.l.b16 %v189
  %v862 = vunpack.c.l.b16 %v190
  %v863 = vunpack.c.l.b16 %v191
  %v864 = vunpack.c.l.b16 %v192
  %v865 = vunpack.c.l.b16 %v193
  %v866 = vunpack.c.l.b16 %v194
  %v867 = vunpack.c.l.b16 %v195
  %v868 = vunpack.c.l.b16 %v196
  %v869 = vunpack.c.l.b16 %v197
  %v870 = vunpack.c.l.b16 %v198
  %v871 = vunpack.c.l.b16 %v199
  %v872 = vunpack.c.l.b16 %v200
  %v873 = vunpack.c.l.b16 %v201
  %v874 = vunpack.c.l.b16 %v202
  %v875 = vunpack.c.l.b16 %v203
  %v876 = vunpack.c.l.b16 %v204
  %v877 = vunpack.c.l.b16 %v205
  %v878 = vunpack.c.l.b16 %v206
  %v879 = vunpack.c.l.b16 %v207
  %v880 = vunpack.c.l.b16 %v208
  %v881 = vunpack.c.l.b16 %v209
  %v882 = vunpack.c.l.b16 %v210
  %v883 = vunpack.c.l.b16 %v211
  %v884 = vunpack.c.l.b16 %v212
  %v885 = vunpack.c.l.b16 %v213
  %v886 = vunpack.c.l.b16 %v214
  %v887 = vunpack.c.l.b16 %v215
  %v888 = vunpack.c.l.b16 %v216
  %v889 = vunpack.c.l.b16 %v217
  %v890 = vunpack.c.l.b16 %v218
  %v891 = vunpack.c.l.b16 %v219
  %v892 = vunpack.c.l.b16 %v220
  %v893 = vunpack.c.l.b16 %v221
  %v894 = vunpack.c.l.b16 %v222
  %v895 = vunpack.c.l.b16 %v223
  %v896 = vunpack.c.l.b16 %v224
  %v897 = vunpack.c.l.b16 %v225
  %v898 = vunpack.c.l.b16 %v226
  %v899 = vunpack.c.l.b16 %v227
  %v900 = vunpack.c.l.b16 %v228
  %v901 = vunpack.c.l.b16 %v229
  %v902 = vunpack.c.l.b16 %v230
  %v903 = vunpack.c.l.b16 %v231
  %v904 = vunpack.c.l.b16 %v232
  %v905 = vunpack.c.l.b16 %v233
  %v906 = vunpack.c.l.b16 %v234
  %v907 = vunpack.c.l.b16 %v235
  %v908 = vunpack.c.l.b16 %v236
  %v909 = vunpack.c.l.b16 %v237
  %v910 = vunpack.c.l.b16 %v238
  %v911 = vunpack.c.l.b16 %v239
  %v912 = vunpack.c.l.b16 %v240
  %v913 = vunpack.c.l.b16 %v241
  %v914 = vunpack.c.l.b16 %v242
  %v915 = vunpack.c.l.b16 %v243
  %v916 = vunpack.c.l.b16 %v244
  %v917 = vunpack.c.l.b16 %v245
  %v918 = vunpack.c.l.b16 %v246
  %v919 = vunpack.c.l.b16 %v247
  %v920 = vunpack.c.l.b16 %v248
  %v921 = vunpack.c.l.b16 %v249
  %v922 = vunpack.c.l.b16 %v250
  %v923 = vunpack.c.l.b16 %v251
  %v924 = vunpack.c.l.b16 %v252
  %v925 = vunpack.c.l.b16 %v253
  %v926 = vunpack.c.l.b16 %v254
  %v927 = vunpack.c.l.b16 %v255
  %v928 = vunpack.c.l.b16 %v256
  %v929 = vunpack.c.l.b16 %v257
  %v930 = vunpack.c.l.b16 %v258
  %v931 = vunpack.c.l.b16 %v259
  %v932 = vunpack.c.l.b16 %v260
  %v933 = vunpack.c.l.b16 %v261
  %v934 = vunpack.c.l.b16 %v262
  %v935 = vunpack.c.l.b16 %v263
  %v936 = vunpack.c.l.b16 %v264
  %v937 = vunpack.c.l.b16 %v265
  %v938 = vunpack.c.l.b16 %v266
  %v939 = vunpack.c.l.b16 %v267
  %v940 = vunpack.c.l.b16 %v268
  %v941 = vunpack.c.l.b16 %v269
  %v942 = vunpack.c.l.b16 %v270
  %v943 = vunpack.c.l.b16 %v271
  %v944 = vunpack.c.l.b16 %v272
  %v945 = vunpack.c.l.b16 %v273
  %v946 = vunpack.c.l.b16 %v274
  %v947 = vunpack.c.l.b16 %v275
  %v948 = vunpack.c.l.b16 %v276
  %v949 = vunpack.c.l.b16 %v277
  %v950 = vunpack.c.l.b16 %v278
  %v951 = vunpack.c.l.b16 %v279
  %v952 = vunpack.c.l.b16 %v280
  %v953 = vunpack.c.l.b16 %v281
  %v954 = vunpack.c.l.b16 %v282
  %v955 = vunpack.c.l.b16 %v283
  %v956 = vunpack.c.l.b16 %v284
  %v957 = vunpack.c.l.b16 %v285
  %v958 = vunpack.c.l.b16 %v286
  %v959 = vunpack.c.l.b16 %v287
  %v960 = vunpack.c.l.b16 %v288
  %v961 = vunpack.c.l.b16 %v289
  %v962 = vunpack.c.l.b16 %v290
  %v963 = vunpack.c.l.b16 %v291
  %v964 = vunpack.c.l.b16 %v292
  %v965 = vunpack.c.l.b16 %v293
  %v966 = vunpack.c.l.b16 %v294
  %v967 = vunpack.c.l.b16 %v295
  %v968 = vunpack.c.l.b16 %v296
  %v969 = vunpack.c.l.b16 %v297
  %v970 = vunpack.c.l.b16 %v298
  %v971 = vunpack.c.l.b16 %v299
  %v972 = vunpack.c.l.b16 %v300
  %v973 = vunpack.c.l.b16 %v301
  %v974 = vpack.c.b16 %v719, %v718
  %v975 = vpack.c.b16 %v721, %v720
  %v976 = vpack.c.b16 %v723, %v722
  %v977 = vpack.c.b16 %v725, %v724
  %v978 = vpack.c.b16 %v727, %v726
  %v979 = vpack.c.b16 %v729, %v728
  %v980 = vpack.c.b16 %v731, %v730
  %v981 = vpack.c.b16 %v733, %v732
  %v982 = vpack.c.b16 %v735, %v734
  %v983 = vpack.c.b16 %v737, %v736
  %v984 = vpack.c.b16 %v739, %v738
  %v985 = vpack.c.b16 %v741, %v740
  %v986 = vpack.c.b16 %v743, %v742
  %v987 = vpack.c.b16 %v745, %v744
  %v988 = vpack.c.b16 %v747, %v746
  %v989 = vpack.c.b16 %v749, %v748
  %v990 = vpack.c.b16 %v751, %v750
  %v991 = vpack.c.b16 %v753, %v752
  %v992 = vpack.c.b16 %v755, %v754
  %v993 = vpack.c.b16 %v757, %v756
  %v994 = vpack.c.b16 %v759, %v758
  %v995 = vpack.c.b16 %v761, %v760
  %v996 = vpack.c.b16 %v763, %v762
  %v997 = vpack.c.b16 %v765, %v764
  %v998 = vpack.c.b16 %v767, %v766
  %v999 = vpack.c.b16 %v769, %v768
  %v1000 = vpack.c.b16 %v771, %v770
  %v1001 = vpack.c.b16 %v773, %v772
  %v1002 = vpack.c.b16 %v775, %v774
  %v1003 = vpack.c.b16 %v777, %v776
  %v1004 = vpack.c.b16 %v779, %v778
  %v1005 = vpack.c.b16 %v781, %v780
  %v1006 = vpack.c.b16 %v783, %v782
  %v1007 = vpack.c.b16 %v785, %v784
  %v1008 = vpack.c.b16 %v787, %v786
  %v1009 = vpack.c.b16 %v789, %v788
  %v1010 = vpack.c.b16 %v791, %v790
  %v1011 = vpack.c.b16 %v793, %v792
  %v1012 = vpack.c.b16 %v795, %v794
  %v1013 = vpack.c.b16 %v797, %v796
  %v1014 = vpack.c.b16 %v799, %v798
  %v1015 = vpack.c.b16 %v801, %v800
  %v1016 = vpack.c.b16 %v803, %v802
  %v1017 = vpack.c.b16 %v805, %v804
  %v1018 = vpack.c.b16 %v807, %v806
  %v1019 = vpack.c.b16 %v809, %v808
  %v1020 = vpack.c.b16 %v811, %v810
  %v1021 = vpack.c.b16 %v813, %v812
  %v1022 = vpack.c.b16 %v815, %v814
  %v1023 = vpack.c.b16 %v817, %v816
  %v1024 = vpack.c.b16 %v819, %v818
  %v1025 = vpack.c.b16 %v821, %v820
  %v1026 = vpack.c.b16 %v823, %v822
  %v1027 = vpack.c.b16 %v825, %v824
  %v1028 = vpack.c.b16 %v827, %v826
  %v1029 = vpack.c.b16 %v829, %v828
  %v1030 = vpack.c.b16 %v831, %v830
  %v1031 = vpack.c.b16 %v833, %v832
  %v1032 = vpack.c.b16 %v835, %v834
  %v1033 = vpack.c.b16 %v837, %v836
  %v1034 = vpack.c.b16 %v839, %v838
  %v1035 = vpack.c.b16 %v841, %v840
  %v1036 = vpack.c.b16 %v843, %v842
  %v1037 = vpack.c.b16 %v845, %v844
  %v1038 = vpack.c.b16 %v847, %v846
  %v1039 = vpack.c.b16 %v849, %v848
  %v1040 = vpack.c.b16 %v851, %v850
  %v1041 = vpack.c.b16 %v853, %v852
  %v1042 = vpack.c.b16 %v855, %v854
  %v1043 = vpack.c.b16 %v857, %v856
  %v1044 = vpack.c.b16 %v859, %v858
  %v1045 = vpack.c.b16 %v861, %v860
  %v1046 = vpack.c.b16 %v863, %v862
  %v1047 = vpack.c.b16 %v865, %v864
  %v1048 = vpack.c.b16 %v867, %v866
  %v1049 = vpack.c.b16 %v869, %v868
  %v1050 = vpack.c.b16 %v871, %v870
  %v1051 = vpack.c.b16 %v873, %v872
  %v1052 = vpack.c.b16 %v875, %v874
  %v1053 = vpack.c.b16 %v877, %v876
  %v1054 = vpack.c.b16 %v879, %v878
  %v1055 = vpack.c.b16 %v881, %v880
  %v1056 = vpack.c.b16 %v883, %v882
  %v1057 = vpack.c.b16 %v885, %v884
  %v1058 = vpack.c.b16 %v887, %v886
  %v1059 = vpack.c.b16 %v889, %v888
  %v1060 = vpack.c.b16 %v891, %v890
  %v1061 = vpack.c.b16 %v893, %v892
  %v1062 = vpack.c.b16 %v895, %v894
  %v1063 = vpack.c.b16 %v897, %v896
  %v1064 = vpack.c.b16 %v899, %v898
  %v1065 = vpack.c.b16 %v901, %v900
  %v1066 = vpack.c.b16 %v903, %v902
  %v1067 = vpack.c.b16 %v905, %v904
  %v1068 = vpack.c.b16 %v907, %v906
  %v1069 = vpack.c.b16 %v909, %v908
  %v1070 = vpack.c.b16 %v911, %v910
  %v1071 = vpack.c.b16 %v913, %v912
  %v1072 = vpack.c.b16 %v915, %v914
  %v1073 = vpack.c.b16 %v917, %v916
  %v1074 = vpack.c.b16 %v919, %v918
  %v1075 = vpack.c.b16 %v921, %v920
  %v1076 = vpack.c.b16 %v923, %v922
  %v1077 = vpack.c.b16 %v925, %v924
  %v1078 = vpack.c.b16 %v927, %v926
  %v1079 = vpack.c.b16 %v929, %v928
  %v1080 = vpack.c.b16 %v931, %v930
  %v1081 = vpack.c.b16 %v933, %v932
  %v1082 = vpack.c.b16 %v935, %v934
  %v1083 = vpack.c.b16 %v937, %v936
  %v1084 = vpack.c.b16 %v939, %v938
  %v1085 = vpack.c.b16 %v941, %v940
  %v1086 = vpack.c.b16 %v943, %v942
  %v1087 = vpack.c.b16 %v945, %v944
  %v1088 = vpack.c.b16 %v947, %v946
  %v1089 = vpack.c.b16 %v949, %v948
  %v1090 = vpack.c.b16 %v951, %v950
  %v1091 = vpack.c.b16 %v953, %v952
  %v1092 = vpack.c.b16 %v955, %v954
  %v1093 = vpack.c.b16 %v957, %v956
  %v1094 = vpack.c.b16 %v959, %v958
  %v1095 = vpack.c.b16 %v961, %v960
  %v1096 = vpack.c.b16 %v963, %v962
  %v1097 = vpack.c.b16 %v965, %v964
  %v1098 = vpack.c.b16 %v967, %v966
  %v1099 = vpack.c.b16 %v969, %v968
  %v1100 = vpack.c.b16 %v971, %v970
  %v1101 = vpack.c.b16 %v973, %v972
  %1230 = vmatpush.bf16.msra.mxu0 %v981
  %1231 = vmatpush.bf16.msra.mxu0 %v980
  %1232 = vmatpush.bf16.msra.mxu0 %v979
  %1233 = vmatpush.bf16.msra.mxu0 %v978
  %1234 = vmatpush.bf16.msra.mxu0 %v977
  %1235 = vmatpush.bf16.msra.mxu0 %v976
  %1236 = vmatpush.bf16.msra.mxu0 %v975
  %1237 = vmatpush.bf16.msra.mxu0 %v974
  %1238 = vmatmul.bf16.gmra.mxu0 %v398
  %v1239 = vpop.f32.mrf.mxu0
  %v1240 = vadd.f32 0.0, %v1239
  %v1241 = vpop.f32.mrf.mxu0
  %v1242 = vadd.f32 0.0, %v1241
  %1243 = vmatmul.bf16.gmra.mxu0 %v414
  %v1244 = vpop.f32.mrf.mxu0
  %v1245 = vadd.f32 0.0, %v1244
  %v1246 = vpop.f32.mrf.mxu0
  %v1247 = vadd.f32 0.0, %v1246
  %1248 = vdwg.mxu0
  %1249 = vmatpush.bf16.msra.mxu0 %v989
  %1250 = vmatpush.bf16.msra.mxu0 %v988
  %1251 = vmatpush.bf16.msra.mxu0 %v987
  %1252 = vmatpush.bf16.msra.mxu0 %v986
  %1253 = vmatpush.bf16.msra.mxu0 %v985
  %1254 = vmatpush.bf16.msra.mxu0 %v984
  %1255 = vmatpush.bf16.msra.mxu0 %v983
  %1256 = vmatpush.bf16.msra.mxu0 %v982
  %1257 = vmatmul.bf16.gmra.mxu0 %v399
  %v1258 = vpop.f32.mrf.mxu0
  %v1259 = vadd.f32 %v1240, %v1258
  %v1260 = vpop.f32.mrf.mxu0
  %v1261 = vadd.f32 %v1242, %v1260
  %1262 = vmatmul.bf16.gmra.mxu0 %v415
  %v1263 = vpop.f32.mrf.mxu0
  %v1264 = vadd.f32 %v1245, %v1263
  %v1265 = vpop.f32.mrf.mxu0
  %v1266 = vadd.f32 %v1247, %v1265
  %1267 = vdwg.mxu0
  %1268 = vmatpush.bf16.msra.mxu0 %v997
  %1269 = vmatpush.bf16.msra.mxu0 %v996
  %1270 = vmatpush.bf16.msra.mxu0 %v995
  %1271 = vmatpush.bf16.msra.mxu0 %v994
  %1272 = vmatpush.bf16.msra.mxu0 %v993
  %1273 = vmatpush.bf16.msra.mxu0 %v992
  %1274 = vmatpush.bf16.msra.mxu0 %v991
  %1275 = vmatpush.bf16.msra.mxu0 %v990
  %1276 = vmatmul.bf16.gmra.mxu0 %v400
  %v1277 = vpop.f32.mrf.mxu0
  %v1278 = vadd.f32 %v1259, %v1277
  %v1279 = vpop.f32.mrf.mxu0
  %v1280 = vadd.f32 %v1261, %v1279
  %1281 = vmatmul.bf16.gmra.mxu0 %v416
  %v1282 = vpop.f32.mrf.mxu0
  %v1283 = vadd.f32 %v1264, %v1282
  %v1284 = vpop.f32.mrf.mxu0
  %v1285 = vadd.f32 %v1266, %v1284
  %1286 = vdwg.mxu0
  %1287 = vmatpush.bf16.msra.mxu0 %v1005
  %1288 = vmatpush.bf16.msra.mxu0 %v1004
  %1289 = vmatpush.bf16.msra.mxu0 %v1003
  %1290 = vmatpush.bf16.msra.mxu0 %v1002
  %1291 = vmatpush.bf16.msra.mxu0 %v1001
  %1292 = vmatpush.bf16.msra.mxu0 %v1000
  %1293 = vmatpush.bf16.msra.mxu0 %v999
  %1294 = vmatpush.bf16.msra.mxu0 %v998
  %1295 = vmatmul.bf16.gmra.mxu0 %v401
  %v1296 = vpop.f32.mrf.mxu0
  %v1297 = vadd.f32 %v1278, %v1296
  %v1298 = vpop.f32.mrf.mxu0
  %v1299 = vadd.f32 %v1280, %v1298
  %1300 = vmatmul.bf16.gmra.mxu0 %v417
  %v1301 = vpop.f32.mrf.mxu0
  %v1302 = vadd.f32 %v1283, %v1301
  %v1303 = vpop.f32.mrf.mxu0
  %v1304 = vadd.f32 %v1285, %v1303
  %1305 = vdwg.mxu0
  %1306 = vmatpush.bf16.msra.mxu0 %v1013
  %1307 = vmatpush.bf16.msra.mxu0 %v1012
  %1308 = vmatpush.bf16.msra.mxu0 %v1011
  %1309 = vmatpush.bf16.msra.mxu0 %v1010
  %1310 = vmatpush.bf16.msra.mxu0 %v1009
  %1311 = vmatpush.bf16.msra.mxu0 %v1008
  %1312 = vmatpush.bf16.msra.mxu0 %v1007
  %1313 = vmatpush.bf16.msra.mxu0 %v1006
  %1314 = vmatmul.bf16.gmra.mxu0 %v402
  %v1315 = vpop.f32.mrf.mxu0
  %v1316 = vadd.f32 %v1297, %v1315
  %v1317 = vpop.f32.mrf.mxu0
  %v1318 = vadd.f32 %v1299, %v1317
  %1319 = vmatmul.bf16.gmra.mxu0 %v418
  %v1320 = vpop.f32.mrf.mxu0
  %v1321 = vadd.f32 %v1302, %v1320
  %v1322 = vpop.f32.mrf.mxu0
  %v1323 = vadd.f32 %v1304, %v1322
  %1324 = vdwg.mxu0
  %1325 = vmatpush.bf16.msra.mxu0 %v1021
  %1326 = vmatpush.bf16.msra.mxu0 %v1020
  %1327 = vmatpush.bf16.msra.mxu0 %v1019
  %1328 = vmatpush.bf16.msra.mxu0 %v1018
  %1329 = vmatpush.bf16.msra.mxu0 %v1017
  %1330 = vmatpush.bf16.msra.mxu0 %v1016
  %1331 = vmatpush.bf16.msra.mxu0 %v1015
  %1332 = vmatpush.bf16.msra.mxu0 %v1014
  %1333 = vmatmul.bf16.gmra.mxu0 %v403
  %v1334 = vpop.f32.mrf.mxu0
  %v1335 = vadd.f32 %v1316, %v1334
  %v1336 = vpop.f32.mrf.mxu0
  %v1337 = vadd.f32 %v1318, %v1336
  %1338 = vmatmul.bf16.gmra.mxu0 %v419
  %v1339 = vpop.f32.mrf.mxu0
  %v1340 = vadd.f32 %v1321, %v1339
  %v1341 = vpop.f32.mrf.mxu0
  %v1342 = vadd.f32 %v1323, %v1341
  %1343 = vdwg.mxu0
  %1344 = vmatpush.bf16.msra.mxu0 %v1029
  %1345 = vmatpush.bf16.msra.mxu0 %v1028
  %1346 = vmatpush.bf16.msra.mxu0 %v1027
  %1347 = vmatpush.bf16.msra.mxu0 %v1026
  %1348 = vmatpush.bf16.msra.mxu0 %v1025
  %1349 = vmatpush.bf16.msra.mxu0 %v1024
  %1350 = vmatpush.bf16.msra.mxu0 %v1023
  %1351 = vmatpush.bf16.msra.mxu0 %v1022
  %1352 = vmatmul.bf16.gmra.mxu0 %v404
  %v1353 = vpop.f32.mrf.mxu0
  %v1354 = vadd.f32 %v1335, %v1353
  %v1355 = vpop.f32.mrf.mxu0
  %v1356 = vadd.f32 %v1337, %v1355
  %1357 = vmatmul.bf16.gmra.mxu0 %v420
  %v1358 = vpop.f32.mrf.mxu0
  %v1359 = vadd.f32 %v1340, %v1358
  %v1360 = vpop.f32.mrf.mxu0
  %v1361 = vadd.f32 %v1342, %v1360
  %1362 = vdwg.mxu0
  %1363 = vmatpush.bf16.msra.mxu0 %v1037
  %1364 = vmatpush.bf16.msra.mxu0 %v1036
  %1365 = vmatpush.bf16.msra.mxu0 %v1035
  %1366 = vmatpush.bf16.msra.mxu0 %v1034
  %1367 = vmatpush.bf16.msra.mxu0 %v1033
  %1368 = vmatpush.bf16.msra.mxu0 %v1032
  %1369 = vmatpush.bf16.msra.mxu0 %v1031
  %1370 = vmatpush.bf16.msra.mxu0 %v1030
  %1371 = vmatmul.bf16.gmra.mxu0 %v405
  %v1372 = vpop.f32.mrf.mxu0
  %v1373 = vadd.f32 %v1354, %v1372
  %v1374 = vpop.f32.mrf.mxu0
  %v1375 = vadd.f32 %v1356, %v1374
  %1376 = vmatmul.bf16.gmra.mxu0 %v421
  %v1377 = vpop.f32.mrf.mxu0
  %v1378 = vadd.f32 %v1359, %v1377
  %v1379 = vpop.f32.mrf.mxu0
  %v1380 = vadd.f32 %v1361, %v1379
  %1381 = vdwg.mxu0
  %1382 = vmatpush.bf16.msra.mxu0 %v1045
  %1383 = vmatpush.bf16.msra.mxu0 %v1044
  %1384 = vmatpush.bf16.msra.mxu0 %v1043
  %1385 = vmatpush.bf16.msra.mxu0 %v1042
  %1386 = vmatpush.bf16.msra.mxu0 %v1041
  %1387 = vmatpush.bf16.msra.mxu0 %v1040
  %1388 = vmatpush.bf16.msra.mxu0 %v1039
  %1389 = vmatpush.bf16.msra.mxu0 %v1038
  %1390 = vmatmul.bf16.gmra.mxu0 %v406
  %v1391 = vpop.f32.mrf.mxu0
  %v1392 = vadd.f32 %v1373, %v1391
  %v1393 = vpop.f32.mrf.mxu0
  %v1394 = vadd.f32 %v1375, %v1393
  %1395 = vmatmul.bf16.gmra.mxu0 %v422
  %v1396 = vpop.f32.mrf.mxu0
  %v1397 = vadd.f32 %v1378, %v1396
  %v1398 = vpop.f32.mrf.mxu0
  %v1399 = vadd.f32 %v1380, %v1398
  %1400 = vdwg.mxu0
  %1401 = vmatpush.bf16.msra.mxu0 %v1053
  %1402 = vmatpush.bf16.msra.mxu0 %v1052
  %1403 = vmatpush.bf16.msra.mxu0 %v1051
  %1404 = vmatpush.bf16.msra.mxu0 %v1050
  %1405 = vmatpush.bf16.msra.mxu0 %v1049
  %1406 = vmatpush.bf16.msra.mxu0 %v1048
  %1407 = vmatpush.bf16.msra.mxu0 %v1047
  %1408 = vmatpush.bf16.msra.mxu0 %v1046
  %1409 = vmatmul.bf16.gmra.mxu0 %v407
  %v1410 = vpop.f32.mrf.mxu0
  %v1411 = vadd.f32 %v1392, %v1410
  %v1412 = vpop.f32.mrf.mxu0
  %v1413 = vadd.f32 %v1394, %v1412
  %1414 = vmatmul.bf16.gmra.mxu0 %v423
  %v1415 = vpop.f32.mrf.mxu0
  %v1416 = vadd.f32 %v1397, %v1415
  %v1417 = vpop.f32.mrf.mxu0
  %v1418 = vadd.f32 %v1399, %v1417
  %1419 = vdwg.mxu0
  %1420 = vmatpush.bf16.msra.mxu0 %v1061
  %1421 = vmatpush.bf16.msra.mxu0 %v1060
  %1422 = vmatpush.bf16.msra.mxu0 %v1059
  %1423 = vmatpush.bf16.msra.mxu0 %v1058
  %1424 = vmatpush.bf16.msra.mxu0 %v1057
  %1425 = vmatpush.bf16.msra.mxu0 %v1056
  %1426 = vmatpush.bf16.msra.mxu0 %v1055
  %1427 = vmatpush.bf16.msra.mxu0 %v1054
  %1428 = vmatmul.bf16.gmra.mxu0 %v408
  %v1429 = vpop.f32.mrf.mxu0
  %v1430 = vadd.f32 %v1411, %v1429
  %v1431 = vpop.f32.mrf.mxu0
  %v1432 = vadd.f32 %v1413, %v1431
  %1433 = vmatmul.bf16.gmra.mxu0 %v424
  %v1434 = vpop.f32.mrf.mxu0
  %v1435 = vadd.f32 %v1416, %v1434
  %v1436 = vpop.f32.mrf.mxu0
  %v1437 = vadd.f32 %v1418, %v1436
  %1438 = vdwg.mxu0
  %1439 = vmatpush.bf16.msra.mxu0 %v1069
  %1440 = vmatpush.bf16.msra.mxu0 %v1068
  %1441 = vmatpush.bf16.msra.mxu0 %v1067
  %1442 = vmatpush.bf16.msra.mxu0 %v1066
  %1443 = vmatpush.bf16.msra.mxu0 %v1065
  %1444 = vmatpush.bf16.msra.mxu0 %v1064
  %1445 = vmatpush.bf16.msra.mxu0 %v1063
  %1446 = vmatpush.bf16.msra.mxu0 %v1062
  %1447 = vmatmul.bf16.gmra.mxu0 %v409
  %v1448 = vpop.f32.mrf.mxu0
  %v1449 = vadd.f32 %v1430, %v1448
  %v1450 = vpop.f32.mrf.mxu0
  %v1451 = vadd.f32 %v1432, %v1450
  %1452 = vmatmul.bf16.gmra.mxu0 %v425
  %v1453 = vpop.f32.mrf.mxu0
  %v1454 = vadd.f32 %v1435, %v1453
  %v1455 = vpop.f32.mrf.mxu0
  %v1456 = vadd.f32 %v1437, %v1455
  %1457 = vdwg.mxu0
  %1458 = vmatpush.bf16.msra.mxu0 %v1077
  %1459 = vmatpush.bf16.msra.mxu0 %v1076
  %1460 = vmatpush.bf16.msra.mxu0 %v1075
  %1461 = vmatpush.bf16.msra.mxu0 %v1074
  %1462 = vmatpush.bf16.msra.mxu0 %v1073
  %1463 = vmatpush.bf16.msra.mxu0 %v1072
  %1464 = vmatpush.bf16.msra.mxu0 %v1071
  %1465 = vmatpush.bf16.msra.mxu0 %v1070
  %1466 = vmatmul.bf16.gmra.mxu0 %v410
  %v1467 = vpop.f32.mrf.mxu0
  %v1468 = vadd.f32 %v1449, %v1467
  %v1469 = vpop.f32.mrf.mxu0
  %v1470 = vadd.f32 %v1451, %v1469
  %1471 = vmatmul.bf16.gmra.mxu0 %v426
  %v1472 = vpop.f32.mrf.mxu0
  %v1473 = vadd.f32 %v1454, %v1472
  %v1474 = vpop.f32.mrf.mxu0
  %v1475 = vadd.f32 %v1456, %v1474
  %1476 = vdwg.mxu0
  %1477 = vmatpush.bf16.msra.mxu0 %v1085
  %1478 = vmatpush.bf16.msra.mxu0 %v1084
  %1479 = vmatpush.bf16.msra.mxu0 %v1083
  %1480 = vmatpush.bf16.msra.mxu0 %v1082
  %1481 = vmatpush.bf16.msra.mxu0 %v1081
  %1482 = vmatpush.bf16.msra.mxu0 %v1080
  %1483 = vmatpush.bf16.msra.mxu0 %v1079
  %1484 = vmatpush.bf16.msra.mxu0 %v1078
  %1485 = vmatmul.bf16.gmra.mxu0 %v411
  %v1486 = vpop.f32.mrf.mxu0
  %v1487 = vadd.f32 %v1468, %v1486
  %v1488 = vpop.f32.mrf.mxu0
  %v1489 = vadd.f32 %v1470, %v1488
  %1490 = vmatmul.bf16.gmra.mxu0 %v427
  %v1491 = vpop.f32.mrf.mxu0
  %v1492 = vadd.f32 %v1473, %v1491
  %v1493 = vpop.f32.mrf.mxu0
  %v1494 = vadd.f32 %v1475, %v1493
  %1495 = vdwg.mxu0
  %1496 = vmatpush.bf16.msra.mxu0 %v1093
  %1497 = vmatpush.bf16.msra.mxu0 %v1092
  %1498 = vmatpush.bf16.msra.mxu0 %v1091
  %1499 = vmatpush.bf16.msra.mxu0 %v1090
  %1500 = vmatpush.bf16.msra.mxu0 %v1089
  %1501 = vmatpush.bf16.msra.mxu0 %v1088
  %1502 = vmatpush.bf16.msra.mxu0 %v1087
  %1503 = vmatpush.bf16.msra.mxu0 %v1086
  %1504 = vmatmul.bf16.gmra.mxu0 %v412
  %v1505 = vpop.f32.mrf.mxu0
  %v1506 = vadd.f32 %v1487, %v1505
  %v1507 = vpop.f32.mrf.mxu0
  %v1508 = vadd.f32 %v1489, %v1507
  %1509 = vmatmul.bf16.gmra.mxu0 %v428
  %v1510 = vpop.f32.mrf.mxu0
  %v1511 = vadd.f32 %v1492, %v1510
  %v1512 = vpop.f32.mrf.mxu0
  %v1513 = vadd.f32 %v1494, %v1512
  %1514 = vdwg.mxu0
  %1515 = vmatpush.bf16.msra.mxu0 %v1101
  %1516 = vmatpush.bf16.msra.mxu0 %v1100
  %1517 = vmatpush.bf16.msra.mxu0 %v1099
  %1518 = vmatpush.bf16.msra.mxu0 %v1098
  %1519 = vmatpush.bf16.msra.mxu0 %v1097
  %1520 = vmatpush.bf16.msra.mxu0 %v1096
  %1521 = vmatpush.bf16.msra.mxu0 %v1095
  %1522 = vmatpush.bf16.msra.mxu0 %v1094
  %1523 = vmatmul.bf16.gmra.mxu0 %v413
  %v1524 = vpop.f32.mrf.mxu0
  %v1525 = vadd.f32 %v1506, %v1524
  %v1526 = vpop.f32.mrf.mxu0
  %v1527 = vadd.f32 %v1508, %v1526
  %1528 = vmatmul.bf16.gmra.mxu0 %v429
  %v1529 = vpop.f32.mrf.mxu0
  %v1530 = vadd.f32 %v1511, %v1529
  %v1531 = vpop.f32.mrf.mxu0
  %v1532 = vadd.f32 %v1513, %v1531
  %1533 = vdwg.mxu0
  %v1534 = vpack.c.bf16 %v1525, %v1525
  %v1535 = vpack.c.bf16 %v1527, %v1527
  %v1536 = vpack.c.bf16 %v1530, %v1530
  %v1537 = vpack.c.bf16 %v1532, %v1532
  %1538 = vst [vmem:[%s2] sm:$0xf] %v1534
  %1539 = vst [vmem:[%s2 + $0x4] sm:$0xf] %v1535
  %1540 = vst [vmem:[%s2 + $0x8] sm:$0xf] %v1536
  %1541 = vst [vmem:[%s2 + $0xc] sm:$0xf] %v1537
  %v1542 = vadd.f32 %v1525, %v1527
  %v1543 = vadd.f32 %v1542, %v1530
  %v1544 = vadd.f32 %v1543, %v1532
  %v1545 = vrot.slane %v1544, 4
  %v1546 = vadd.f32 %v1544, %v1545
  %v1547 = vrot.slane %v1546, 2
  %v1548 = vadd.f32 %v1546, %v1547
  %v1549 = vrot.slane %v1548, 1
  %v1550 = vadd.f32 %v1548, %v1549
  %1551 = vst [vmem:[%s3] sm:$0x1] %v1550
  %v1552 = vmul.f32 %v1525, %v1525
  %v1553 = vmul.f32 %v1527, %v1527
  %v1554 = vmul.f32 %v1530, %v1530
  %v1555 = vmul.f32 %v1532, %v1532
  %v1556 = vadd.f32 %v1552, %v1553
  %v1557 = vadd.f32 %v1556, %v1554
  %v1558 = vadd.f32 %v1557, %v1555
  %v1559 = vrot.slane %v1558, 4
  %v1560 = vadd.f32 %v1558, %v1559
  %v1561 = vrot.slane %v1560, 2
  %v1562 = vadd.f32 %v1560, %v1561
  %v1563 = vrot.slane %v1562, 1
  %v1564 = vadd.f32 %v1562, %v1563
  %1565 = vst [vmem:[%s4] sm:$0x1] %v1564
  // Predicated region
  $region10: #{discriminator_forward.6} parent=0 // pred_check
    _
  $region11: #{discriminator_forward.6} parent=0 // pred_check_branch
    %1567 = sbr.rel (0) target = $region13
  $region12: #{discriminator_forward.6} parent=0 // pred_region
    _
  $region13: #{discriminator_forward.6} parent=0 // pred_fallthru
    _
  // Predicated region
  $region14: #{discriminator_forward.6} parent=0 // pred_check
    _
  $region15: #{discriminator_forward.6} parent=0 // pred_check_branch
    %1569 = sbr.rel (0) target = $region17
  $region16: #{discriminator_forward.6} parent=0 // pred_region
    _
  $region17: #{discriminator_forward.6} parent=0 // pred_fallthru
    _
  // Predicated region
  $region18: #{discriminator_forward.6} parent=0 // pred_check
    _
  $region19: #{discriminator_forward.6} parent=0 // pred_check_branch
    %1571 = sbr.rel (0) target = $region21
  $region20: #{discriminator_forward.6} parent=0 // pred_region
    _
  $region21: #{discriminator_forward.6} parent=0 // pred_fallthru
    _
  // Predicated region
  $region22: #{discriminator_forward.6} parent=0 // pred_check
    _
  $region23: #{discriminator_forward.6} parent=0 // pred_check_branch
    %1573 = sbr.rel (0) target = $region25
  $region24: #{discriminator_forward.6} parent=0 // pred_region
    _
  $region25: #{discriminator_forward.6} parent=0 // pred_fallthru
    _
  // Predicated region
  $region26: #{discriminator_forward.6} parent=0 // pred_check
    _
  $region27: #{discriminator_forward.6} parent=0 // pred_check_branch
    %1575 = sbr.rel (0) target = $region29
  $region28: #{discriminator_forward.6} parent=0 // pred_region
    _
  $region29: #{discriminator_forward.6} parent=0 // pred_fallthru
    _
  // Predicated region
  $region30: #{discriminator_forward.6} parent=0 // pred_check
    _
  $region31: #{discriminator_forward.6} parent=0 // pred_check_branch
    %1577 = sbr.rel (0) target = $region33
  $region32: #{discriminator_forward.6} parent=0 // pred_region
    _
  $region33: #{discriminator_forward.6} parent=0 // pred_fallthru
    _

</llo_original>
